<compile_context>
chip_gen: v7x
topology: tpu7x:2x2x1
jax: 0.10.0
libtpu: 0.0.40
codegen_flags: <defaults>
</compile_context>

<pallas_src>
import math
import functools

import jax
import jax.numpy as jnp
from jax.experimental import pallas as pl
from jax.experimental.pallas import tpu as pltpu

EMB_DIM = 512


def _round_up(v, m):
    return (v + m - 1) // m * m


def _tpu_vmem_bytes():
    # Physical VMEM per TensorCore; conservative v7x fallback if the query is
    # unavailable in this environment.
    try:
        info = pltpu.get_tpu_info()
        return int(getattr(info, "vmem_capacity_bytes", 64 << 20))
    except Exception:
        return 64 << 20


def _spherenet_kernel(x_ref, wemb_ref, bemb_ref, wfcT_hbm, label_ref, out_ref,
                      acc_ref, wfc_vmem, wfc_sem, *, loss_type, s, m, lamb):
    k = pl.program_id(1)
    nk = pl.num_programs(1)

    @pl.when(k == 0)
    def _():
        acc_ref[...] = jnp.zeros_like(acc_ref)
        # Kick off the single-buffered head-weight DMA so it overlaps with the
        # entire K reduction of this batch tile (BlockSpec would double-buffer
        # this grid-invariant tensor; manual copy keeps one resident copy).
        pltpu.make_async_copy(wfcT_hbm, wfc_vmem, wfc_sem).start()

    # Streaming K-reduction of the embedding matmul: bf16 operands, f32 acc.
    acc_ref[...] += jnp.dot(x_ref[...], wemb_ref[...],
                            preferred_element_type=jnp.float32)

    @pl.when(k == nk - 1)
    def _():
        pltpu.make_async_copy(wfcT_hbm, wfc_vmem, wfc_sem).wait()

        emb = acc_ref[...] + bemb_ref[...]                        # [tb, 512] f32

        # ||emb||_2 per row (single cross-lane reduce, reused by sphere_loss).
        sq = jnp.sum(emb * emb, axis=1, keepdims=True)
        feat_norm = jnp.sqrt(sq)                                  # torch.norm(input,2,1)
        inv_norm = pl.reciprocal(jnp.maximum(feat_norm, 1e-12), approx=True)

        # cosine = normalize(emb) @ normalize(w_fc)^T.  The head weight is
        # already row-normalized + transposed + bf16 in the wrapper, so this is
        # a native bf16 MXU matmul followed by a per-row scale.
        raw = jnp.dot(emb.astype(jnp.bfloat16), wfc_vmem[...],
                      preferred_element_type=jnp.float32)
        cosine = raw * inv_norm                                   # [tb, C_pad] f32

        tb, cpad = out_ref.shape
        class_ids = jax.lax.broadcasted_iota(jnp.int32, (tb, cpad), 1)
        is_tgt = class_ids == label_ref[...]                      # scatter_ equivalent

        if loss_type == "cos_loss":
            # AddMarginProduct: cos(theta) - m
            out = jnp.where(is_tgt, cosine - m, cosine) * s

        elif loss_type == "arc_loss":
            # ArcMarginProduct: cos(theta + m), easy_margin=False
            cos_m = math.cos(m)
            sin_m = math.sin(m)
            th = math.cos(math.pi - m)
            mm = math.sin(math.pi - m) * m
            sine = jnp.sqrt(jnp.clip(1.0 - cosine * cosine, 0.0, 1.0))
            phi = cosine * cos_m - sine * sin_m
            phi = jnp.where(cosine > th, phi, cosine - mm)
            out = jnp.where(is_tgt, phi, cosine) * s

        elif loss_type == "sphere_loss":
            # SphereProduct, m = 4: cos(4*theta) = 8x^4 - 8x^2 + 1
            cos_t = jnp.clip(cosine, -1.0, 1.0)
            x2 = cos_t * cos_t
            cos_m_theta = 8.0 * x2 * x2 - 8.0 * x2 + 1.0
            # k = floor(m * acos(cos_t) / 3.14159265), acos-free via the
            # monotonicity of cos on [0, pi].
            kk = jnp.zeros_like(cos_t)
            for j in range(1, int(m) + 1):
                thr = math.cos(j * 3.14159265 / float(m))
                kk = kk + (cos_t <= thr).astype(jnp.float32)
            sign = 1.0 - 2.0 * jnp.mod(kk, 2.0)                    # (-1)^k
            phi_theta = sign * cos_m_theta - 2.0 * kk
            tgt = (phi_theta - cos_t) / (1.0 + lamb) + cos_t
            out = jnp.where(is_tgt, tgt, cos_t) * feat_norm

        else:
            # TODO(synk): the nn.Linear fallback head is unreachable in the
            # reference SphereNet.forward (it is always called as fc(x, targets)).
            out = cosine * s

        out_ref[...] = out.astype(out_ref.dtype)


def spherenet_forward(params, x_nchw, labels, *, loss_type, classnum,
                      s=30.0, m=0.5, lamb=0.0, tk=None, tb_max=None,
                      num_cores=1):
    B = x_nchw.shape[0]
    x_flat = x_nchw.reshape(B, -1)
    D = x_flat.shape[1]

    # Per-generation sizing: v5e/v6e have 128 MiB VMEM per core, v7x has 64 MiB.
    phys_vmem = _tpu_vmem_bytes()
    big_vmem = phys_vmem >= (96 << 20)
    if tb_max is None:
        tb_max = 512 if big_vmem else 256
    if tk is None:
        tk = 8192 if big_vmem else 4096
    vmem_budget = (phys_vmem * 3) // 4            # headroom for Mosaic internals

    # ---- batch tiling (sublane multiple of 8) ----
    B_pad = _round_up(max(B, 8), 8)
    tb = min(tb_max, B_pad)
    if num_cores > 1 and B_pad // tb < num_cores and B_pad >= 8 * num_cores:
        # v7x megacore: give every TensorCore at least one batch tile.
        tb = _round_up(-(-B_pad // num_cores), 8)
    B_pad = _round_up(B_pad, tb)
    nb = B_pad // tb

    C_pad = _round_up(max(classnum, 128), 128)    # lane-dense logits

    # ---- VMEM accounting (bf16 single-buffered head weight, f32 acc) ----
    resident = (4 * tb * EMB_DIM                  # f32 accumulator
                + 2 * EMB_DIM * C_pad             # single-buffered bf16 head weight
                + 2 * 4 * tb * C_pad              # double-buffered f32 output tile
                + 2 * 4 * EMB_DIM                 # bias
                + 2 * 4 * tb)                     # labels
    headroom = 8 << 20
    # TODO(synk): for classnum in the tens of thousands the resident head
    # weight + output tile outgrow VMEM; split into an embedding kernel plus a
    # class-tiled margin-head kernel instead of one fused call.
    stream_budget = max(vmem_budget - resident - headroom,
                        4 * 128 * (tb + EMB_DIM))
    tk_fit = max(128, (stream_budget // (4 * (tb + EMB_DIM))) // 128 * 128)

    # ---- K tiling: round D to 128 only, rebalance tk so zero-padding of the
    # bandwidth-bound weight stream is minimal (no round-up of D to a full tk).
    D128 = _round_up(D, 128)
    tk = max(128, min(_round_up(tk, 128), tk_fit, D128))
    nk = -(-D128 // tk)
    tk = _round_up(-(-D128 // nk), 128)
    D_pad = nk * tk

    needed = resident + 2 * 2 * tk * (tb + EMB_DIM) + headroom   # + bf16 streams
    vmem_limit = int(min(max(needed, 32 << 20), (phys_vmem * 15) // 16))

    # bf16 streaming operands for the bandwidth-bound embedding matmul;
    # zero padding contributes nothing to the reduction.
    x_p = jnp.zeros((B_pad, D_pad), jnp.bfloat16).at[:B, :D].set(
        x_flat.astype(jnp.bfloat16))
    w_emb = jnp.zeros((D_pad, EMB_DIM), jnp.bfloat16).at[:D, :].set(
        params["w_emb"].astype(jnp.bfloat16))
    b_emb = params["b_emb"].astype(jnp.float32).reshape(1, EMB_DIM)

    # Hoist the batch-independent head-weight normalization + transpose +
    # class padding out of the kernel, and store it bf16 (native MXU dtype;
    # padded columns are zero so their logits are harmless and sliced off).
    w_fc = params["w_fc"].astype(jnp.float32)
    w_fc_n = w_fc / jnp.maximum(
        jnp.sqrt(jnp.sum(w_fc * w_fc, axis=1, keepdims=True)), 1e-12)
    w_fcT = jnp.zeros((EMB_DIM, C_pad), jnp.bfloat16).at[:, :classnum].set(
        w_fc_n.T.astype(jnp.bfloat16))

    labels2d = jnp.zeros((B_pad, 1), jnp.int32).at[:B, 0].set(
        labels.astype(jnp.int32).reshape(B))

    kernel = functools.partial(_spherenet_kernel, loss_type=loss_type,
                               s=s, m=m, lamb=lamb)
    out_pad = pl.pallas_call(
        kernel,
        out_shape=jax.ShapeDtypeStruct((B_pad, C_pad), jnp.float32),
        grid=(nb, nk),
        in_specs=[
            pl.BlockSpec((tb, tk), lambda b, k: (b, k)),          # x tile
            pl.BlockSpec((tk, EMB_DIM), lambda b, k: (k, 0)),     # w_emb tile
            pl.BlockSpec((1, EMB_DIM), lambda b, k: (0, 0)),      # b_emb
            pl.BlockSpec(memory_space=pl.ANY),                    # w_fc^T (HBM, manual DMA)
            pl.BlockSpec((tb, 1), lambda b, k: (b, 0)),           # labels
        ],
        out_specs=pl.BlockSpec((tb, C_pad), lambda b, k: (b, 0)),
        scratch_shapes=[
            pltpu.VMEM((tb, EMB_DIM), jnp.float32),       # f32 accumulator
            pltpu.VMEM((EMB_DIM, C_pad), jnp.bfloat16),   # single-buffered head weight
            pltpu.SemaphoreType.DMA,                      # its DMA semaphore
        ],
        compiler_params=pltpu.CompilerParams(
            dimension_semantics=("parallel", "arbitrary"),
            vmem_limit_bytes=vmem_limit),
    )(x_p, w_emb, b_emb, w_fcT, labels2d)

    return out_pad[:B, :classnum]


def init_params(key, in_dim, classnum):
    k1, k2 = jax.random.split(key, 2)
    # embedding_net stand-in weights (deterministic)
    w_emb = jax.random.normal(k1, (in_dim, EMB_DIM), jnp.float32) / math.sqrt(in_dim)
    b_emb = jnp.zeros((1, EMB_DIM), jnp.float32)
    # nn.init.xavier_uniform_ for the [classnum, 512] margin-head weight
    bound = math.sqrt(6.0 / (EMB_DIM + classnum))
    w_fc = jax.random.uniform(k2, (classnum, EMB_DIM), jnp.float32, -bound, bound)
    return {"w_emb": w_emb, "b_emb": b_emb, "w_fc": w_fc}


def _reference_cos_loss(params, x_nchw, labels, classnum, *, s, m):
    # Pure-JAX reference for the branch-free cos_loss head, mirroring the
    # kernel's bf16 operand streams (embedding matmul and head matmul).
    B = x_nchw.shape[0]
    x_flat = x_nchw.reshape(B, -1).astype(jnp.bfloat16).astype(jnp.float32)
    w_emb = params["w_emb"].astype(jnp.bfloat16).astype(jnp.float32)
    emb = x_flat @ w_emb + params["b_emb"].astype(jnp.float32)
    norm = jnp.maximum(jnp.sqrt(jnp.sum(emb * emb, axis=1, keepdims=True)), 1e-12)
    w_fc = params["w_fc"].astype(jnp.float32)
    w_n = w_fc / jnp.maximum(
        jnp.sqrt(jnp.sum(w_fc * w_fc, axis=1, keepdims=True)), 1e-12)
    emb_bf = emb.astype(jnp.bfloat16).astype(jnp.float32)
    w_bf = w_n.astype(jnp.bfloat16).astype(jnp.float32)
    cosine = (emb_bf @ w_bf.T) / norm
    one_hot = jax.nn.one_hot(labels, classnum, dtype=jnp.float32)
    return (one_hot * (cosine - m) + (1.0 - one_hot) * cosine) * s


if __name__ == "__main__":
    key = jax.random.PRNGKey(0)
    B, C, H, W = 2, 4, 16, 16
    classnum = 97

    kx, kl, kp = jax.random.split(key, 3)
    x = jax.random.normal(kx, (B, C, H, W), jnp.float32)          # (input, targets) = x
    labels = jax.random.randint(kl, (B,), 0, classnum, jnp.int32)
    params = init_params(kp, C * H * W, classnum)

    # lamb for SphereProduct at iter == 1 (forward increments self.iter then
    # computes max(LambdaMin, base * (1 + gamma*iter) ** -power))
    sphere_lamb = max(5.0, 1000.0 * (1.0 + 0.12 * 1) ** -1)

    configs = [
        dict(loss_type="cos_loss",    s=30.0, m=0.35, lamb=0.0),
        dict(loss_type="arc_loss",    s=30.0, m=0.5,  lamb=0.0),
        dict(loss_type="sphere_loss", s=30.0, m=4,    lamb=sphere_lamb),
    ]
    outs = {}
    for cfg in configs:
        # tk=512 so the small test exercises a multi-step K-reduction pipeline.
        out = spherenet_forward(params, x, labels, classnum=classnum, tk=512, **cfg)
        out = jax.block_until_ready(out)
        assert out.shape == (B, classnum), (cfg["loss_type"], out.shape)
        assert bool(jnp.all(jnp.isfinite(out))), cfg["loss_type"]
        outs[cfg["loss_type"]] = out

    # Numerical check on the continuous (branch-free) head.  Tolerance covers
    # the approx EUP reciprocal and f32 accumulation-order differences at s=30.
    ref = _reference_cos_loss(params, x, labels, classnum, s=30.0, m=0.35)
    max_err = float(jnp.max(jnp.abs(outs["cos_loss"] - ref)))
    assert max_err < 5e-2, max_err

    print("KERNEL_OK")
</pallas_src>

<mosaic_0001>
module attributes {stable_mosaic.version = 11 : i64} {
  func.func @_spherenet_kernel(%arg0: i32, %arg1: i32, %arg2: memref<8x512xbf16, #tpu.memory_space<vmem>>, %arg3: memref<512x512xbf16, #tpu.memory_space<vmem>>, %arg4: memref<1x512xf32, #tpu.memory_space<vmem>>, %arg5: memref<512x128xbf16, #tpu.memory_space<any>>, %arg6: memref<8x1xi32, #tpu.memory_space<vmem>>, %arg7: memref<8x128xf32, #tpu.memory_space<vmem>>, %arg8: memref<8x512xf32, #tpu.memory_space<vmem>>, %arg9: memref<512x128xbf16, #tpu.memory_space<vmem>>, %arg10: memref<!tpu.dma_semaphore, #tpu.memory_space<semaphore_mem>>) attributes {dimension_semantics = [#tpu.dimension_semantics<parallel>, #tpu.dimension_semantics<arbitrary>], iteration_bounds = array<i64: 1, 2>, scalar_prefetch = 0 : i64, scratch_operands = 3 : i64, tpu.core_type = #tpu.core_type<tc>, window_params = [{transform_indices = @transform_0, window_bounds = array<i64: 8, 512>}, {transform_indices = @transform_1, window_bounds = array<i64: 512, 512>}, {pipeline_mode = #tpu.pipeline_mode<synchronous>, transform_indices = @transform_2, window_bounds = array<i64: 1, 512>}, {}, {transform_indices = @transform_4, window_bounds = array<i64: 8, 1>}, {transform_indices = @transform_5, window_bounds = array<i64: 8, 128>}]} {
    %c0_i32 = arith.constant 0 : i32
    %0 = arith.cmpi eq, %arg1, %c0_i32 : i32
    %1 = arith.extui %0 : i1 to i32
    %c0_i32_0 = arith.constant 0 : i32
    %2 = arith.cmpi ne, %1, %c0_i32_0 : i32
    scf.if %2 {
      %cst_9 = arith.constant 0.000000e+00 : f32
      %12 = vector.broadcast %cst_9 : f32 to vector<8x512xf32>
      %c0_10 = arith.constant 0 : index
      %c0_11 = arith.constant 0 : index
      %13 = vector.load %arg8[%c0_10, %c0_11] : memref<8x512xf32, #tpu.memory_space<vmem>>, vector<8x512xf32>
      tpu.vector_store %arg8[%c0_10, %c0_11], %12 {strides = array<i32>} : memref<8x512xf32, #tpu.memory_space<vmem>>, vector<8x512xf32>,
      tpu.enqueue_dma source(%arg5 : memref<512x128xbf16, #tpu.memory_space<any>>) target(%arg9 : memref<512x128xbf16, #tpu.memory_space<vmem>>) target_semaphore(%arg10 : memref<!tpu.dma_semaphore, #tpu.memory_space<semaphore_mem>>)
    } else {
    }
    %c0 = arith.constant 0 : index
    %c0_1 = arith.constant 0 : index
    %3 = vector.load %arg8[%c0, %c0_1] : memref<8x512xf32, #tpu.memory_space<vmem>>, vector<8x512xf32>
    %c0_2 = arith.constant 0 : index
    %c0_3 = arith.constant 0 : index
    %4 = vector.load %arg2[%c0_2, %c0_3] : memref<8x512xbf16, #tpu.memory_space<vmem>>, vector<8x512xbf16>
    %c0_4 = arith.constant 0 : index
    %c0_5 = arith.constant 0 : index
    %5 = vector.load %arg3[%c0_4, %c0_5] : memref<512x512xbf16, #tpu.memory_space<vmem>>, vector<512x512xbf16>
    %cst = arith.constant dense<0.000000e+00> : vector<8x512xf32>
    %6 = tpu.matmul %4, %5, %cst {dimension_numbers = #tpu.dot_dimension_numbers<[1], [0], [0], [1], [0, 0, 1, 1], [], []>} : vector<8x512xbf16>, vector<512x512xbf16>, vector<8x512xf32> -> vector<8x512xf32>
    %7 = arith.addf %3, %6 : vector<8x512xf32>
    %c0_6 = arith.constant 0 : index
    %c0_7 = arith.constant 0 : index
    %8 = vector.load %arg8[%c0_6, %c0_7] : memref<8x512xf32, #tpu.memory_space<vmem>>, vector<8x512xf32>
    tpu.vector_store %arg8[%c0_6, %c0_7], %7 {strides = array<i32>} : memref<8x512xf32, #tpu.memory_space<vmem>>, vector<8x512xf32>,
    %c1_i32 = arith.constant 1 : i32
    %9 = arith.cmpi eq, %arg1, %c1_i32 : i32
    %10 = arith.extui %9 : i1 to i32
    %c0_i32_8 = arith.constant 0 : i32
    %11 = arith.cmpi ne, %10, %c0_i32_8 : i32
    scf.if %11 {
      tpu.wait_dma2 semaphore(%arg10 : memref<!tpu.dma_semaphore, #tpu.memory_space<semaphore_mem>>) src(%arg5 : memref<512x128xbf16, #tpu.memory_space<any>>) dst(%arg9 : memref<512x128xbf16, #tpu.memory_space<vmem>>)
      %c0_9 = arith.constant 0 : index
      %c0_10 = arith.constant 0 : index
      %12 = vector.load %arg8[%c0_9, %c0_10] : memref<8x512xf32, #tpu.memory_space<vmem>>, vector<8x512xf32>
      %c0_11 = arith.constant 0 : index
      %c0_12 = arith.constant 0 : index
      %13 = vector.load %arg4[%c0_11, %c0_12] : memref<1x512xf32, #tpu.memory_space<vmem>>, vector<1x512xf32>
      %14 = vector.broadcast %13 : vector<1x512xf32> to vector<8x512xf32>
      %15 = arith.addf %12, %14 : vector<8x512xf32>
      %16 = arith.mulf %15, %15 : vector<8x512xf32>
      %cst_13 = arith.constant dense<0.000000e+00> : vector<8xf32>
      %17 = vector.multi_reduction <add>, %16, %cst_13 [1] : vector<8x512xf32> to vector<8xf32>
      %18 = vector.shape_cast %17 : vector<8xf32> to vector<8x1xf32>
      %19 = math.sqrt %18 : vector<8x1xf32>
      %cst_14 = arith.constant 9.99999996E-13 : f32
      %20 = vector.broadcast %cst_14 : f32 to vector<8x1xf32>
      %21 = arith.maximumf %19, %20 : vector<8x1xf32>
      %22 = tpu.reciprocal %21 {approx = true} : vector<8x1xf32> -> vector<8x1xf32>
      %23 = arith.truncf %15 : vector<8x512xf32> to vector<8x512xbf16>
      %c0_15 = arith.constant 0 : index
      %c0_16 = arith.constant 0 : index
      %24 = vector.load %arg9[%c0_15, %c0_16] : memref<512x128xbf16, #tpu.memory_space<vmem>>, vector<512x128xbf16>
      %cst_17 = arith.constant dense<0.000000e+00> : vector<8x128xf32>
      %25 = tpu.matmul %23, %24, %cst_17 {dimension_numbers = #tpu.dot_dimension_numbers<[1], [0], [0], [1], [0, 0, 1, 1], [], []>} : vector<8x512xbf16>, vector<512x128xbf16>, vector<8x128xf32> -> vector<8x128xf32>
      %26 = vector.broadcast %22 : vector<8x1xf32> to vector<8x128xf32>
      %27 = arith.mulf %25, %26 : vector<8x128xf32>
      %28 = tpu.iota {dimensions = array<i32: 1>} : vector<8x128xi32>
      %c0_18 = arith.constant 0 : index
      %c0_19 = arith.constant 0 : index
      %29 = vector.load %arg6[%c0_18, %c0_19] : memref<8x1xi32, #tpu.memory_space<vmem>>, vector<8x1xi32>
      %30 = vector.broadcast %29 : vector<8x1xi32> to vector<8x128xi32>
      %31 = arith.cmpi eq, %28, %30 : vector<8x128xi32>
      %cst_20 = arith.constant 3.500000e-01 : f32
      %32 = vector.broadcast %cst_20 : f32 to vector<8x128xf32>
      %33 = arith.subf %27, %32 : vector<8x128xf32>
      %34 = arith.select %31, %33, %27 : vector<8x128xi1>, vector<8x128xf32>
      %cst_21 = arith.constant 3.000000e+01 : f32
      %35 = vector.broadcast %cst_21 : f32 to vector<8x128xf32>
      %36 = arith.mulf %34, %35 : vector<8x128xf32>
      %c0_22 = arith.constant 0 : index
      %c0_23 = arith.constant 0 : index
      %37 = vector.load %arg7[%c0_22, %c0_23] : memref<8x128xf32, #tpu.memory_space<vmem>>, vector<8x128xf32>
      tpu.vector_store %arg7[%c0_22, %c0_23], %36 {strides = array<i32>} : memref<8x128xf32, #tpu.memory_space<vmem>>, vector<8x128xf32>,
    } else {
    }
    return
  }
  func.func @transform_0(%arg0: i32, %arg1: i32) -> (i32, i32) {
    %c0_i32 = arith.constant 0 : i32
    return %arg0, %arg1 : i32, i32
  }
  func.func @transform_1(%arg0: i32, %arg1: i32) -> (i32, i32) {
    %c0_i32 = arith.constant 0 : i32
    %c0_i32_0 = arith.constant 0 : i32
    return %arg1, %c0_i32 : i32, i32
  }
  func.func @transform_2(%arg0: i32, %arg1: i32) -> (i32, i32) {
    %c0_i32 = arith.constant 0 : i32
    %c0_i32_0 = arith.constant 0 : i32
    %c0_i32_1 = arith.constant 0 : i32
    return %c0_i32, %c0_i32_0 : i32, i32
  }
  func.func @transform_4(%arg0: i32, %arg1: i32) -> (i32, i32) {
    %c0_i32 = arith.constant 0 : i32
    %c0_i32_0 = arith.constant 0 : i32
    return %arg0, %c0_i32 : i32, i32
  }
  func.func @transform_5(%arg0: i32, %arg1: i32) -> (i32, i32) {
    %c0_i32 = arith.constant 0 : i32
    %c0_i32_0 = arith.constant 0 : i32
    return %arg0, %c0_i32 : i32, i32
  }
}

</mosaic_0001>

<llo_original>
// kernel: tpu_custom_call.1
$region0: #{tpu_custom_call.1}
  #allocation0 [shape = 'u32[]', space=smem, size = 0x4, offset = 0x4, fixed_abs, tag = 'smem constant byte address 0x4 - core index']
  #allocation1 [shape = 'u32[144,128]{1,0:T(1,128)}', space=vmem, size = 0x12000, scoped, tag = 'internal scratch']
  #allocation2 [shape = 'f32[8,512]{1,0:T(8,128)}', space=vmem, size = 0x4000, scoped, tag = 'scratch operand']
  #allocation3 [shape = 'bf16[512,128]{1,0:T(16,128)(2,1)}', space=vmem, size = 0x20000, scoped, tag = 'scratch operand']
  #allocation4 [shape = 's32[1]{0}', space=sflag, size = 0x4, scoped, tag = 'scratch operand']
  #allocation11 [shape = 's32[]', space=sflag, size = 0x4, offset = 0, fixed_abs, tag = 'sflag constant byte address 0x0 - dummy sync flag']
  #allocation12 [shape = 's32[]', space=sflag, size = 0x4, offset = 0, fixed_abs, tag = 'sflag constant byte address 0x0 - dummy sync flag']
  #allocation13 [shape = 'u32[]', space=smem, size = 0x4, offset = 0x44, fixed_abs, tag = 'smem constant byte address 0x44 - assertion arg 0']
  #allocation14 [shape = 'u32[]', space=smem, size = 0x4, offset = 0x48, fixed_abs, tag = 'smem constant byte address 0x48 - assertion arg 1']
  %s0 = inlined_call_operand.hbm [shape: bf16[8,1024], index: 0, kind: input, shape index: {}]
  %s1 = inlined_call_operand.hbm [shape: bf16[1024,512], index: 1, kind: input, shape index: {}]
  %s2 = inlined_call_operand.vmem [shape: f32[1,512], index: 2, kind: input, shape index: {}]
  %s3 = inlined_call_operand.hbm [shape: bf16[512,128], index: 3, kind: input, shape index: {}]
  %s4 = inlined_call_operand.vmem [shape: s32[8,1], index: 4, kind: input, shape index: {}]
  %s5 = inlined_call_operand.hbm [shape: f32[8,128], index: 5, kind: output, shape index: {}]
  %s6 = sld [smem:[#allocation0]]
  $region69: #{tpu_custom_call.1} parent=0
    _
  %s8 = ssub.s32 1, %s6
  %s9 = scalar_select 0, %s8, %s6
  $region1: #{tpu_custom_call.1} parent=0
    #allocation5 [shape = 'u8[16384]{0}', space=vmem, size = 0x4000, scoped, tag = 'input window, operand 0']
    #allocation6 [shape = 's32[2]{0}', space=sflag, size = 0x8, scoped, tag = 'scoped memory for tpu_custom_call.1']
    #allocation7 [shape = 's32[2]{0}', space=sflag, size = 0x8, scoped, tag = 'scoped memory for tpu_custom_call.1']
    #allocation8 [shape = 'u8[1048576]{0}', space=vmem, size = 0x100000, scoped, tag = 'input window, operand 1']
    #allocation9 [shape = 's32[2]{0}', space=sflag, size = 0x8, scoped, tag = 'scoped memory for tpu_custom_call.1']
    #allocation10 [shape = 'u8[4096]{0}', space=vmem, size = 0x1000, scoped, tag = 'output window, operand 0, single buffered']
    %10 = vsyncpa [#allocation6], 0
    %s11 = scalar_lea.sflag [#allocation6], 1
    %12 = vsyncpa %s11, 0
    %13 = vsyncpa [#allocation9], 0
    %s14 = scalar_lea.sflag [#allocation9], 1
    %15 = vsyncpa %s14, 0
    %16 = vsyncpa [#allocation7], 0
    loop: start=0, step=1, limit=4
    $region2: #{tpu_custom_call.1} parent=1 // loop_pre_header
      _
    $region3: #{tpu_custom_call.1} parent=1 // loop_header
      %s18 = sphi 0, %s22
      %p19 = scmp.ge.s32.totalorder %s18, 4
      %s25 = sphi 0, %s37
      %s26 = sphi 0, %s33
      %s27 = sphi 0, %s25
      %s28 = sphi 0, %s26
      %s29 = sphi 0, %s27
      %s30 = sphi 0, %s28
      %s42 = sphi 0, %s44
      %s45 = sphi 0, %s42
      %s46 = sphi 0, %s45
      %s62 = sphi 0, %s46
      %s68 = sphi 0, %s70
      %s71 = sphi 0, %s68
      %s72 = sphi 0, %s71
      %s88 = sphi 0, %s72
      %s92 = sphi 0, %s92
      %s94 = sphi 0, %s92
      %s95 = sphi 0, %s94
      %s109 = sphi 0, %s95
      %s115 = sphi 0, %s117
      %s118 = sphi 0, %s115
      %s119 = sphi 0, %s118
      %s135 = sphi 0, %s119
      %s141 = sphi 0, %s143
      %s144 = sphi 0, %s141
      %s145 = sphi 0, %s144
      %s161 = sphi 0, %s145
    $region4: #{tpu_custom_call.1} parent=1 // loop_header_branch
      %21 = sbr.rel (%p19) target = $region8
    $region5: #{tpu_custom_call.1} parent=1 // loop_body
      %s23 = ssub.s32 %s18, 1
      %s24 = ssub.s32 %s18, 2
      %s31 = sadd.s32 1, %s26
      %p32 = scmp.ge.s32.totalorder %s31, 2
      %s33 = scalar_select %p32, 0, %s31
      %s34 = sadd.s32 1, %s25
      %s35 = scalar_select %p32, %s34, %s25
      %p36 = scmp.ge.s32.totalorder %s35, 1
      %s37 = scalar_select %p36, 0, %s35
      %s38 = ssub.s32 %s25, %s37
      %s39 = ssub.s32 %s26, %s33
      %s40 = sor.u32 %s38, %s39
      %p41 = scmp.eq.s32.totalorder %s40, 0
      %s43 = sadd.s32 %s42, 1
      %s44 = scalar_select %p41, %s42, %s43
      %p47 = pneg %p41
      %p48 = scmp.eq.s32.totalorder %s18, 1
      %p49 = por %p47, %p48
      %p50 = scmp.ne.s32.totalorder %s42, %s45
      %p51 = scmp.eq.s32.totalorder %s18, 0
      %p52 = por %p50, %p51
      %p53 = scmp.ne.s32.totalorder %s42, %s45
      %p54 = scmp.eq.s32.totalorder %s23, 1
      %p55 = por %p53, %p54
      %p56 = scmp.ne.s32.totalorder %s45, %s46
      %p57 = scmp.eq.s32.totalorder %s23, 0
      %p58 = por %p56, %p57
      %p59 = scmp.ne.s32.totalorder %s45, %s46
      %p60 = scmp.eq.s32.totalorder %s24, 1
      %p61 = por %p59, %p60
      %p63 = scmp.ne.s32.totalorder %s46, %s62
      %p64 = scmp.eq.s32.totalorder %s24, 0
      %p65 = por %p63, %p64
      %s66 = ssub.s32 %s26, %s33
      %p67 = scmp.eq.s32.totalorder %s66, 0
      %s69 = sadd.s32 %s68, 1
      %s70 = scalar_select %p67, %s68, %s69
      %p73 = pneg %p67
      %p74 = scmp.eq.s32.totalorder %s18, 1
      %p75 = por %p73, %p74
      %p76 = scmp.ne.s32.totalorder %s68, %s71
      %p77 = scmp.eq.s32.totalorder %s18, 0
      %p78 = por %p76, %p77
      %p79 = scmp.ne.s32.totalorder %s68, %s71
      %p80 = scmp.eq.s32.totalorder %s23, 1
      %p81 = por %p79, %p80
      %p82 = scmp.ne.s32.totalorder %s71, %s72
      %p83 = scmp.eq.s32.totalorder %s23, 0
      %p84 = por %p82, %p83
      %p85 = scmp.ne.s32.totalorder %s71, %s72
      %p86 = scmp.eq.s32.totalorder %s24, 1
      %p87 = por %p85, %p86
      %p89 = scmp.ne.s32.totalorder %s72, %s88
      %p90 = scmp.eq.s32.totalorder %s24, 0
      %p91 = por %p89, %p90
      %s93 = sadd.s32 %s92, 1
      %p96 = scmp.eq.s32.totalorder %s18, 1
      %p97 = scmp.ne.s32.totalorder %s92, %s94
      %p98 = scmp.eq.s32.totalorder %s18, 0
      %p99 = por %p97, %p98
      %p100 = scmp.ne.s32.totalorder %s92, %s94
      %p101 = scmp.eq.s32.totalorder %s23, 1
      %p102 = por %p100, %p101
      %p103 = scmp.ne.s32.totalorder %s94, %s95
      %p104 = scmp.eq.s32.totalorder %s23, 0
      %p105 = por %p103, %p104
      %p106 = scmp.ne.s32.totalorder %s94, %s95
      %p107 = scmp.eq.s32.totalorder %s24, 1
      %p108 = por %p106, %p107
      %p110 = scmp.ne.s32.totalorder %s95, %s109
      %p111 = scmp.eq.s32.totalorder %s24, 0
      %p112 = por %p110, %p111
      %s113 = ssub.s32 %s25, %s37
      %p114 = scmp.eq.s32.totalorder %s113, 0
      %s116 = sadd.s32 %s115, 1
      %s117 = scalar_select %p114, %s115, %s116
      %p120 = pneg %p114
      %p121 = scmp.eq.s32.totalorder %s18, 1
      %p122 = por %p120, %p121
      %p123 = scmp.ne.s32.totalorder %s115, %s118
      %p124 = scmp.eq.s32.totalorder %s18, 0
      %p125 = por %p123, %p124
      %p126 = scmp.ne.s32.totalorder %s115, %s118
      %p127 = scmp.eq.s32.totalorder %s23, 1
      %p128 = por %p126, %p127
      %p129 = scmp.ne.s32.totalorder %s118, %s119
      %p130 = scmp.eq.s32.totalorder %s23, 0
      %p131 = por %p129, %p130
      %p132 = scmp.ne.s32.totalorder %s118, %s119
      %p133 = scmp.eq.s32.totalorder %s24, 1
      %p134 = por %p132, %p133
      %p136 = scmp.ne.s32.totalorder %s119, %s135
      %p137 = scmp.eq.s32.totalorder %s24, 0
      %p138 = por %p136, %p137
      %s139 = ssub.s32 %s25, %s37
      %p140 = scmp.eq.s32.totalorder %s139, 0
      %s142 = sadd.s32 %s141, 1
      %s143 = scalar_select %p140, %s141, %s142
      %p146 = pneg %p140
      %p147 = scmp.eq.s32.totalorder %s18, 1
      %p148 = por %p146, %p147
      %p149 = scmp.ne.s32.totalorder %s141, %s144
      %p150 = scmp.eq.s32.totalorder %s18, 0
      %p151 = por %p149, %p150
      %p152 = scmp.ne.s32.totalorder %s141, %s144
      %p153 = scmp.eq.s32.totalorder %s23, 1
      %p154 = por %p152, %p153
      %p155 = scmp.ne.s32.totalorder %s144, %s145
      %p156 = scmp.eq.s32.totalorder %s23, 0
      %p157 = por %p155, %p156
      %p158 = scmp.ne.s32.totalorder %s144, %s145
      %p159 = scmp.eq.s32.totalorder %s24, 1
      %p160 = por %p158, %p159
      %p162 = scmp.ne.s32.totalorder %s145, %s161
      %p163 = scmp.eq.s32.totalorder %s24, 0
      %p164 = por %p162, %p163
      %p165 = scmp.le.s32.totalorder 1, %s18
      %p166 = scmp.lt.s32.totalorder %s18, 3
      %p167 = pnand %p165, %p166
      %p168 = pneg %p167
      // Predicated region
      $region9: #{tpu_custom_call.1} parent=5 // pred_check
        _
      $region10: #{tpu_custom_call.1} parent=5 // pred_check_branch
        %170 = sbr.rel (%p167) target = $region12
      $region11: #{tpu_custom_call.1} parent=5 // pred_region
        %s171 = ssub.s32 %s18, 1
        // Predicated region
        $region13: #{tpu_custom_call.1} parent=11 // pred_check
          %p172 = pneg %p105
        $region14: #{tpu_custom_call.1} parent=11 // pred_check_branch
          %174 = sbr.rel (%p172) target = $region16
        $region15: #{tpu_custom_call.1} parent=11 // pred_region
          _
        $region16: #{tpu_custom_call.1} parent=11 // pred_fallthru
          _
        // Predicated region
        $region17: #{tpu_custom_call.1} parent=11 // pred_check
          %p175 = pneg %p131
        $region18: #{tpu_custom_call.1} parent=11 // pred_check_branch
          %177 = sbr.rel (%p175) target = $region20
        $region19: #{tpu_custom_call.1} parent=11 // pred_region
          %p178 = scmp.lt.s32.totalorder %s27, 0
          %s179 = scalar_select %p178, %s27, 0
          %s180 = smul.addr %s179, 8
          %s181 = scalar_lea.vmem %s4, %s180
        $region20: #{tpu_custom_call.1} parent=11 // pred_fallthru
          _
      $region12: #{tpu_custom_call.1} parent=5 // pred_fallthru
        _
      %p182 = scmp.lt.s32.totalorder %s18, 2
      // Predicated region
      $region21: #{tpu_custom_call.1} parent=5 // pred_check
        %p183 = pneg %p182
      $region22: #{tpu_custom_call.1} parent=5 // pred_check_branch
        %185 = sbr.rel (%p183) target = $region24
      $region23: #{tpu_custom_call.1} parent=5 // pred_region
        // Predicated region
        $region25: #{tpu_custom_call.1} parent=23 // pred_check
          %p186 = pneg %p52
        $region26: #{tpu_custom_call.1} parent=23 // pred_check_branch
          %188 = sbr.rel (%p186) target = $region28
        $region27: #{tpu_custom_call.1} parent=23 // pred_region
          %s189 = sand.u32 %s42, 1
          %s190 = scalar_lea.sflag [#allocation6], %s189
          %s191 = sand.u32 %s42, 1
          %s192 = smul.addr %s191, 16
          %s193 = scalar_lea.vmem [#allocation5], %s192
          %s194 = smul.u32 4, %s26
          %s196 = ssub.s32 256, 256
          %197 = vsyncadd %s190, %s196
          %s198 = smul.addr %s25, 8
          %s199 = sadd.s32 %s194, %s198
          %s200 = smul.addr %s199, 64
          %s201 = scalar_lea.hbm %s0, %s200
          %s203 = sshll.u32 %s193, 4
          %s204 = int_to_ptr.vmem [resolvable:$true] %s203
          %206 = dma.hbm_to_vmem [thread:$0]  %s201, 256, %s204, %s190
        $region28: #{tpu_custom_call.1} parent=23 // pred_fallthru
          _
        // Predicated region
        $region29: #{tpu_custom_call.1} parent=23 // pred_check
          %p207 = pneg %p78
        $region30: #{tpu_custom_call.1} parent=23 // pred_check_branch
          %209 = sbr.rel (%p207) target = $region32
        $region31: #{tpu_custom_call.1} parent=23 // pred_region
          %s210 = sand.u32 %s68, 1
          %s211 = scalar_lea.sflag [#allocation9], %s210
          %s212 = sand.u32 %s68, 1
          %s213 = smul.addr %s212, 1024
          %s214 = scalar_lea.vmem [#allocation8], %s213
          %s215 = smul.u32 64, %s26
          %s217 = ssub.s32 16384, 16384
          %218 = vsyncadd %s211, %s217
          %s219 = smul.addr %s215, 4
          %s220 = smul.addr %s219, 64
          %s221 = scalar_lea.hbm %s1, %s220
          %s222 = sshll.u32 %s214, 4
          %s223 = int_to_ptr.vmem [resolvable:$true] %s222
          %228 = dma.hbm_to_vmem [thread:$0]  %s221, 16384, %s223, %s211, 256, 256, 16
        $region32: #{tpu_custom_call.1} parent=23 // pred_fallthru
          _
      $region24: #{tpu_custom_call.1} parent=5 // pred_fallthru
        _
      %p229 = scmp.le.s32.totalorder 1, %s18
      %p230 = scmp.lt.s32.totalorder %s18, 3
      %p231 = pnand %p229, %p230
      %p232 = pneg %p231
      // Predicated region
      $region33: #{tpu_custom_call.1} parent=5 // pred_check
        _
      $region34: #{tpu_custom_call.1} parent=5 // pred_check_branch
        %234 = sbr.rel (%p231) target = $region36
      $region35: #{tpu_custom_call.1} parent=5 // pred_region
        %s235 = ssub.s32 %s18, 1
        %s236 = sand.u32 %s45, 1
        %s237 = scalar_lea.sflag [#allocation6], %s236
        %s238 = sand.u32 %s45, 1
        %s239 = smul.addr %s238, 16
        %s240 = scalar_lea.vmem [#allocation5], %s239
        // Predicated region
        $region37: #{tpu_custom_call.1} parent=35 // pred_check
          %p241 = pneg %p58
        $region38: #{tpu_custom_call.1} parent=35 // pred_check_branch
          %243 = sbr.rel (%p241) target = $region40
        $region39: #{tpu_custom_call.1} parent=35 // pred_region
          %244 = dma.done %s237, 256
        $region40: #{tpu_custom_call.1} parent=35 // pred_fallthru
          _
        %s245 = sand.u32 %s71, 1
        %s246 = scalar_lea.sflag [#allocation9], %s245
        %s247 = sand.u32 %s71, 1
        %s248 = smul.addr %s247, 1024
        %s249 = scalar_lea.vmem [#allocation8], %s248
        // Predicated region
        $region41: #{tpu_custom_call.1} parent=35 // pred_check
          %p250 = pneg %p84
        $region42: #{tpu_custom_call.1} parent=35 // pred_check_branch
          %252 = sbr.rel (%p250) target = $region44
        $region43: #{tpu_custom_call.1} parent=35 // pred_region
          %253 = dma.done %s246, 16384
        $region44: #{tpu_custom_call.1} parent=35 // pred_fallthru
          _
        %s254 = sand.u32 %s45, 1
        %s255 = scalar_lea.sflag [#allocation6], %s254
        %s256 = sand.u32 %s45, 1
        %s257 = smul.addr %s256, 16
        %s258 = scalar_lea.vmem [#allocation5], %s257
        %p259 = pneg %p58
        %p260 = pneg %p55
        %s261 = sand.u32 %s71, 1
        %s262 = scalar_lea.sflag [#allocation9], %s261
        %s263 = sand.u32 %s71, 1
        %s264 = smul.addr %s263, 1024
        %s265 = scalar_lea.vmem [#allocation8], %s264
        %p266 = pneg %p84
        %p267 = pneg %p81
        %p268 = pneg %p105
        %p269 = pneg %p102
        %p270 = scmp.lt.s32.totalorder %s27, 0
        %s271 = scalar_select %p270, %s27, 0
        %s272 = smul.addr %s271, 8
        %s273 = scalar_lea.vmem %s4, %s272
        %p274 = pneg %p131
        %p275 = pneg %p128
        %p276 = pneg %p157
        %p277 = pneg %p154
        %s278 = smul.u32 4, %s28
        %s279 = smul.u32 64, %s28
        %p280 = scmp.lt.s32.totalorder %s27, 0
        %s281 = scalar_select %p280, %s27, 0
        %s282 = smul.addr %s281, 8
        %s283 = scalar_lea.vmem %s4, %s282
        %p285 = scmp.eq.s32.totalorder %s28, 0
        // Predicated region
        $region45: #{tpu_custom_call.1} parent=35 // pred_check
          %p286 = pneg %p285
        $region46: #{tpu_custom_call.1} parent=35 // pred_check_branch
          %288 = sbr.rel (%p286) target = $region48
        $region47: #{tpu_custom_call.1} parent=35 // pred_region
          %289 = vst [vmem:[#allocation2] sm:$0xff] 0.0
          %290 = vst [vmem:[#allocation2 + $0x8] sm:$0xff] 0.0
          %291 = vst [vmem:[#allocation2 + $0x10] sm:$0xff] 0.0
          %292 = vst [vmem:[#allocation2 + $0x18] sm:$0xff] 0.0
          // Predicated region
          $region49: #{tpu_custom_call.1} parent=47 // pred_check
            _
          $region50: #{tpu_custom_call.1} parent=47 // pred_check_branch
            %294 = sbr.rel target = $region52
          $region51: #{tpu_custom_call.1} parent=47 // pred_region
            %295 = sst [smem:[#allocation13]] [#allocation12]
            %296 = sst [smem:[#allocation14]] [#allocation11]
          $region52: #{tpu_custom_call.1} parent=47 // pred_fallthru
            _
          %298 = shalt.err (0)
          %s300 = sshll.u32 [#allocation3], 4
          %s301 = int_to_ptr.vmem [resolvable:$true] %s300
          %303 = dma.hbm_to_vmem [thread:$0]  %s3, 4096, %s301, [#allocation4]
        $region48: #{tpu_custom_call.1} parent=35 // pred_fallthru
          _
        %v304 = vld [vmem:[#allocation2] sm:$0xff]
        %v305 = vld [vmem:[#allocation2 + $0x8] sm:$0xff]
        %v306 = vld [vmem:[#allocation2 + $0x10] sm:$0xff]
        %v307 = vld [vmem:[#allocation2 + $0x18] sm:$0xff]
        %v308 = vld [vmem:[%s240] sm:$0xff]
        %v309 = vld [vmem:[%s240 + $0x8] sm:$0xff]
        %v310 = vld [vmem:[%s249] sm:$0xff]
        %v311 = vld [vmem:[%s249 + $0x8] sm:$0xff]
        %v312 = vld [vmem:[%s249 + $0x10] sm:$0xff]
        %v313 = vld [vmem:[%s249 + $0x18] sm:$0xff]
        %v314 = vld [vmem:[%s249 + $0x20] sm:$0xff]
        %v315 = vld [vmem:[%s249 + $0x28] sm:$0xff]
        %v316 = vld [vmem:[%s249 + $0x30] sm:$0xff]
        %v317 = vld [vmem:[%s249 + $0x38] sm:$0xff]
        %v318 = vld [vmem:[%s249 + $0x40] sm:$0xff]
        %v319 = vld [vmem:[%s249 + $0x48] sm:$0xff]
        %v320 = vld [vmem:[%s249 + $0x50] sm:$0xff]
        %v321 = vld [vmem:[%s249 + $0x58] sm:$0xff]
        %v322 = vld [vmem:[%s249 + $0x60] sm:$0xff]
        %v323 = vld [vmem:[%s249 + $0x68] sm:$0xff]
        %v324 = vld [vmem:[%s249 + $0x70] sm:$0xff]
        %v325 = vld [vmem:[%s249 + $0x78] sm:$0xff]
        %v326 = vld [vmem:[%s249 + $0x80] sm:$0xff]
        %v327 = vld [vmem:[%s249 + $0x88] sm:$0xff]
        %v328 = vld [vmem:[%s249 + $0x90] sm:$0xff]
        %v329 = vld [vmem:[%s249 + $0x98] sm:$0xff]
        %v330 = vld [vmem:[%s249 + $0xa0] sm:$0xff]
        %v331 = vld [vmem:[%s249 + $0xa8] sm:$0xff]
        %v332 = vld [vmem:[%s249 + $0xb0] sm:$0xff]
        %v333 = vld [vmem:[%s249 + $0xb8] sm:$0xff]
        %v334 = vld [vmem:[%s249 + $0xc0] sm:$0xff]
        %v335 = vld [vmem:[%s249 + $0xc8] sm:$0xff]
        %v336 = vld [vmem:[%s249 + $0xd0] sm:$0xff]
        %v337 = vld [vmem:[%s249 + $0xd8] sm:$0xff]
        %v338 = vld [vmem:[%s249 + $0xe0] sm:$0xff]
        %v339 = vld [vmem:[%s249 + $0xe8] sm:$0xff]
        %v340 = vld [vmem:[%s249 + $0xf0] sm:$0xff]
        %v341 = vld [vmem:[%s249 + $0xf8] sm:$0xff]
        %v342 = vld [vmem:[%s249 + $0x100] sm:$0xff]
        %v343 = vld [vmem:[%s249 + $0x108] sm:$0xff]
        %v344 = vld [vmem:[%s249 + $0x110] sm:$0xff]
        %v345 = vld [vmem:[%s249 + $0x118] sm:$0xff]
        %v346 = vld [vmem:[%s249 + $0x120] sm:$0xff]
        %v347 = vld [vmem:[%s249 + $0x128] sm:$0xff]
        %v348 = vld [vmem:[%s249 + $0x130] sm:$0xff]
        %v349 = vld [vmem:[%s249 + $0x138] sm:$0xff]
        %v350 = vld [vmem:[%s249 + $0x140] sm:$0xff]
        %v351 = vld [vmem:[%s249 + $0x148] sm:$0xff]
        %v352 = vld [vmem:[%s249 + $0x150] sm:$0xff]
        %v353 = vld [vmem:[%s249 + $0x158] sm:$0xff]
        %v354 = vld [vmem:[%s249 + $0x160] sm:$0xff]
        %v355 = vld [vmem:[%s249 + $0x168] sm:$0xff]
        %v356 = vld [vmem:[%s249 + $0x170] sm:$0xff]
        %v357 = vld [vmem:[%s249 + $0x178] sm:$0xff]
        %v358 = vld [vmem:[%s249 + $0x180] sm:$0xff]
        %v359 = vld [vmem:[%s249 + $0x188] sm:$0xff]
        %v360 = vld [vmem:[%s249 + $0x190] sm:$0xff]
        %v361 = vld [vmem:[%s249 + $0x198] sm:$0xff]
        %v362 = vld [vmem:[%s249 + $0x1a0] sm:$0xff]
        %v363 = vld [vmem:[%s249 + $0x1a8] sm:$0xff]
        %v364 = vld [vmem:[%s249 + $0x1b0] sm:$0xff]
        %v365 = vld [vmem:[%s249 + $0x1b8] sm:$0xff]
        %v366 = vld [vmem:[%s249 + $0x1c0] sm:$0xff]
        %v367 = vld [vmem:[%s249 + $0x1c8] sm:$0xff]
        %v368 = vld [vmem:[%s249 + $0x1d0] sm:$0xff]
        %v369 = vld [vmem:[%s249 + $0x1d8] sm:$0xff]
        %v370 = vld [vmem:[%s249 + $0x1e0] sm:$0xff]
        %v371 = vld [vmem:[%s249 + $0x1e8] sm:$0xff]
        %v372 = vld [vmem:[%s249 + $0x1f0] sm:$0xff]
        %v373 = vld [vmem:[%s249 + $0x1f8] sm:$0xff]
        %v374 = vld [vmem:[%s249 + $0x200] sm:$0xff]
        %v375 = vld [vmem:[%s249 + $0x208] sm:$0xff]
        %v376 = vld [vmem:[%s249 + $0x210] sm:$0xff]
        %v377 = vld [vmem:[%s249 + $0x218] sm:$0xff]
        %v378 = vld [vmem:[%s249 + $0x220] sm:$0xff]
        %v379 = vld [vmem:[%s249 + $0x228] sm:$0xff]
        %v380 = vld [vmem:[%s249 + $0x230] sm:$0xff]
        %v381 = vld [vmem:[%s249 + $0x238] sm:$0xff]
        %v382 = vld [vmem:[%s249 + $0x240] sm:$0xff]
        %v383 = vld [vmem:[%s249 + $0x248] sm:$0xff]
        %v384 = vld [vmem:[%s249 + $0x250] sm:$0xff]
        %v385 = vld [vmem:[%s249 + $0x258] sm:$0xff]
        %v386 = vld [vmem:[%s249 + $0x260] sm:$0xff]
        %v387 = vld [vmem:[%s249 + $0x268] sm:$0xff]
        %v388 = vld [vmem:[%s249 + $0x270] sm:$0xff]
        %v389 = vld [vmem:[%s249 + $0x278] sm:$0xff]
        %v390 = vld [vmem:[%s249 + $0x280] sm:$0xff]
        %v391 = vld [vmem:[%s249 + $0x288] sm:$0xff]
        %v392 = vld [vmem:[%s249 + $0x290] sm:$0xff]
        %v393 = vld [vmem:[%s249 + $0x298] sm:$0xff]
        %v394 = vld [vmem:[%s249 + $0x2a0] sm:$0xff]
        %v395 = vld [vmem:[%s249 + $0x2a8] sm:$0xff]
        %v396 = vld [vmem:[%s249 + $0x2b0] sm:$0xff]
        %v397 = vld [vmem:[%s249 + $0x2b8] sm:$0xff]
        %v398 = vld [vmem:[%s249 + $0x2c0] sm:$0xff]
        %v399 = vld [vmem:[%s249 + $0x2c8] sm:$0xff]
        %v400 = vld [vmem:[%s249 + $0x2d0] sm:$0xff]
        %v401 = vld [vmem:[%s249 + $0x2d8] sm:$0xff]
        %v402 = vld [vmem:[%s249 + $0x2e0] sm:$0xff]
        %v403 = vld [vmem:[%s249 + $0x2e8] sm:$0xff]
        %v404 = vld [vmem:[%s249 + $0x2f0] sm:$0xff]
        %v405 = vld [vmem:[%s249 + $0x2f8] sm:$0xff]
        %v406 = vld [vmem:[%s249 + $0x300] sm:$0xff]
        %v407 = vld [vmem:[%s249 + $0x308] sm:$0xff]
        %v408 = vld [vmem:[%s249 + $0x310] sm:$0xff]
        %v409 = vld [vmem:[%s249 + $0x318] sm:$0xff]
        %v410 = vld [vmem:[%s249 + $0x320] sm:$0xff]
        %v411 = vld [vmem:[%s249 + $0x328] sm:$0xff]
        %v412 = vld [vmem:[%s249 + $0x330] sm:$0xff]
        %v413 = vld [vmem:[%s249 + $0x338] sm:$0xff]
        %v414 = vld [vmem:[%s249 + $0x340] sm:$0xff]
        %v415 = vld [vmem:[%s249 + $0x348] sm:$0xff]
        %v416 = vld [vmem:[%s249 + $0x350] sm:$0xff]
        %v417 = vld [vmem:[%s249 + $0x358] sm:$0xff]
        %v418 = vld [vmem:[%s249 + $0x360] sm:$0xff]
        %v419 = vld [vmem:[%s249 + $0x368] sm:$0xff]
        %v420 = vld [vmem:[%s249 + $0x370] sm:$0xff]
        %v421 = vld [vmem:[%s249 + $0x378] sm:$0xff]
        %v422 = vld [vmem:[%s249 + $0x380] sm:$0xff]
        %v423 = vld [vmem:[%s249 + $0x388] sm:$0xff]
        %v424 = vld [vmem:[%s249 + $0x390] sm:$0xff]
        %v425 = vld [vmem:[%s249 + $0x398] sm:$0xff]
        %v426 = vld [vmem:[%s249 + $0x3a0] sm:$0xff]
        %v427 = vld [vmem:[%s249 + $0x3a8] sm:$0xff]
        %v428 = vld [vmem:[%s249 + $0x3b0] sm:$0xff]
        %v429 = vld [vmem:[%s249 + $0x3b8] sm:$0xff]
        %v430 = vld [vmem:[%s249 + $0x3c0] sm:$0xff]
        %v431 = vld [vmem:[%s249 + $0x3c8] sm:$0xff]
        %v432 = vld [vmem:[%s249 + $0x3d0] sm:$0xff]
        %v433 = vld [vmem:[%s249 + $0x3d8] sm:$0xff]
        %v434 = vld [vmem:[%s249 + $0x3e0] sm:$0xff]
        %v435 = vld [vmem:[%s249 + $0x3e8] sm:$0xff]
        %v436 = vld [vmem:[%s249 + $0x3f0] sm:$0xff]
        %v437 = vld [vmem:[%s249 + $0x3f8] sm:$0xff]
        %v440 = vunpack.c.l.b16 %v308
        %v441 = vunpack.c.h.b16 %v308
        %v442 = vunpack.c.l.b16 %v309
        %v443 = vunpack.c.h.b16 %v309
        %v444 = vpack.c.b16 %v440, %v440
        %v445 = vpack.c.b16 %v441, %v441
        %v446 = vpack.c.b16 %v442, %v442
        %v447 = vpack.c.b16 %v443, %v443
        %v580 = vunpack.c.l.b16 %v310
        %v581 = vunpack.c.h.b16 %v310
        %v582 = vunpack.c.l.b16 %v311
        %v583 = vunpack.c.h.b16 %v311
        %v584 = vunpack.c.l.b16 %v312
        %v585 = vunpack.c.h.b16 %v312
        %v586 = vunpack.c.l.b16 %v313
        %v587 = vunpack.c.h.b16 %v313
        %v588 = vunpack.c.l.b16 %v314
        %v589 = vunpack.c.h.b16 %v314
        %v590 = vunpack.c.l.b16 %v315
        %v591 = vunpack.c.h.b16 %v315
        %v592 = vunpack.c.l.b16 %v316
        %v593 = vunpack.c.h.b16 %v316
        %v594 = vunpack.c.l.b16 %v317
        %v595 = vunpack.c.h.b16 %v317
        %v596 = vunpack.c.l.b16 %v318
        %v597 = vunpack.c.h.b16 %v318
        %v598 = vunpack.c.l.b16 %v319
        %v599 = vunpack.c.h.b16 %v319
        %v600 = vunpack.c.l.b16 %v320
        %v601 = vunpack.c.h.b16 %v320
        %v602 = vunpack.c.l.b16 %v321
        %v603 = vunpack.c.h.b16 %v321
        %v604 = vunpack.c.l.b16 %v322
        %v605 = vunpack.c.h.b16 %v322
        %v606 = vunpack.c.l.b16 %v323
        %v607 = vunpack.c.h.b16 %v323
        %v608 = vunpack.c.l.b16 %v324
        %v609 = vunpack.c.h.b16 %v324
        %v610 = vunpack.c.l.b16 %v325
        %v611 = vunpack.c.h.b16 %v325
        %v612 = vunpack.c.l.b16 %v326
        %v613 = vunpack.c.h.b16 %v326
        %v614 = vunpack.c.l.b16 %v327
        %v615 = vunpack.c.h.b16 %v327
        %v616 = vunpack.c.l.b16 %v328
        %v617 = vunpack.c.h.b16 %v328
        %v618 = vunpack.c.l.b16 %v329
        %v619 = vunpack.c.h.b16 %v329
        %v620 = vunpack.c.l.b16 %v330
        %v621 = vunpack.c.h.b16 %v330
        %v622 = vunpack.c.l.b16 %v331
        %v623 = vunpack.c.h.b16 %v331
        %v624 = vunpack.c.l.b16 %v332
        %v625 = vunpack.c.h.b16 %v332
        %v626 = vunpack.c.l.b16 %v333
        %v627 = vunpack.c.h.b16 %v333
        %v628 = vunpack.c.l.b16 %v334
        %v629 = vunpack.c.h.b16 %v334
        %v630 = vunpack.c.l.b16 %v335
        %v631 = vunpack.c.h.b16 %v335
        %v632 = vunpack.c.l.b16 %v336
        %v633 = vunpack.c.h.b16 %v336
        %v634 = vunpack.c.l.b16 %v337
        %v635 = vunpack.c.h.b16 %v337
        %v636 = vunpack.c.l.b16 %v338
        %v637 = vunpack.c.h.b16 %v338
        %v638 = vunpack.c.l.b16 %v339
        %v639 = vunpack.c.h.b16 %v339
        %v640 = vunpack.c.l.b16 %v340
        %v641 = vunpack.c.h.b16 %v340
        %v642 = vunpack.c.l.b16 %v341
        %v643 = vunpack.c.h.b16 %v341
        %v644 = vunpack.c.l.b16 %v342
        %v645 = vunpack.c.h.b16 %v342
        %v646 = vunpack.c.l.b16 %v343
        %v647 = vunpack.c.h.b16 %v343
        %v648 = vunpack.c.l.b16 %v344
        %v649 = vunpack.c.h.b16 %v344
        %v650 = vunpack.c.l.b16 %v345
        %v651 = vunpack.c.h.b16 %v345
        %v652 = vunpack.c.l.b16 %v346
        %v653 = vunpack.c.h.b16 %v346
        %v654 = vunpack.c.l.b16 %v347
        %v655 = vunpack.c.h.b16 %v347
        %v656 = vunpack.c.l.b16 %v348
        %v657 = vunpack.c.h.b16 %v348
        %v658 = vunpack.c.l.b16 %v349
        %v659 = vunpack.c.h.b16 %v349
        %v660 = vunpack.c.l.b16 %v350
        %v661 = vunpack.c.h.b16 %v350
        %v662 = vunpack.c.l.b16 %v351
        %v663 = vunpack.c.h.b16 %v351
        %v664 = vunpack.c.l.b16 %v352
        %v665 = vunpack.c.h.b16 %v352
        %v666 = vunpack.c.l.b16 %v353
        %v667 = vunpack.c.h.b16 %v353
        %v668 = vunpack.c.l.b16 %v354
        %v669 = vunpack.c.h.b16 %v354
        %v670 = vunpack.c.l.b16 %v355
        %v671 = vunpack.c.h.b16 %v355
        %v672 = vunpack.c.l.b16 %v356
        %v673 = vunpack.c.h.b16 %v356
        %v674 = vunpack.c.l.b16 %v357
        %v675 = vunpack.c.h.b16 %v357
        %v676 = vunpack.c.l.b16 %v358
        %v677 = vunpack.c.h.b16 %v358
        %v678 = vunpack.c.l.b16 %v359
        %v679 = vunpack.c.h.b16 %v359
        %v680 = vunpack.c.l.b16 %v360
        %v681 = vunpack.c.h.b16 %v360
        %v682 = vunpack.c.l.b16 %v361
        %v683 = vunpack.c.h.b16 %v361
        %v684 = vunpack.c.l.b16 %v362
        %v685 = vunpack.c.h.b16 %v362
        %v686 = vunpack.c.l.b16 %v363
        %v687 = vunpack.c.h.b16 %v363
        %v688 = vunpack.c.l.b16 %v364
        %v689 = vunpack.c.h.b16 %v364
        %v690 = vunpack.c.l.b16 %v365
        %v691 = vunpack.c.h.b16 %v365
        %v692 = vunpack.c.l.b16 %v366
        %v693 = vunpack.c.h.b16 %v366
        %v694 = vunpack.c.l.b16 %v367
        %v695 = vunpack.c.h.b16 %v367
        %v696 = vunpack.c.l.b16 %v368
        %v697 = vunpack.c.h.b16 %v368
        %v698 = vunpack.c.l.b16 %v369
        %v699 = vunpack.c.h.b16 %v369
        %v700 = vunpack.c.l.b16 %v370
        %v701 = vunpack.c.h.b16 %v370
        %v702 = vunpack.c.l.b16 %v371
        %v703 = vunpack.c.h.b16 %v371
        %v704 = vunpack.c.l.b16 %v372
        %v705 = vunpack.c.h.b16 %v372
        %v706 = vunpack.c.l.b16 %v373
        %v707 = vunpack.c.h.b16 %v373
        %v708 = vunpack.c.l.b16 %v374
        %v709 = vunpack.c.h.b16 %v374
        %v710 = vunpack.c.l.b16 %v375
        %v711 = vunpack.c.h.b16 %v375
        %v712 = vunpack.c.l.b16 %v376
        %v713 = vunpack.c.h.b16 %v376
        %v714 = vunpack.c.l.b16 %v377
        %v715 = vunpack.c.h.b16 %v377
        %v716 = vunpack.c.l.b16 %v378
        %v717 = vunpack.c.h.b16 %v378
        %v718 = vunpack.c.l.b16 %v379
        %v719 = vunpack.c.h.b16 %v379
        %v720 = vunpack.c.l.b16 %v380
        %v721 = vunpack.c.h.b16 %v380
        %v722 = vunpack.c.l.b16 %v381
        %v723 = vunpack.c.h.b16 %v381
        %v724 = vunpack.c.l.b16 %v382
        %v725 = vunpack.c.h.b16 %v382
        %v726 = vunpack.c.l.b16 %v383
        %v727 = vunpack.c.h.b16 %v383
        %v728 = vunpack.c.l.b16 %v384
        %v729 = vunpack.c.h.b16 %v384
        %v730 = vunpack.c.l.b16 %v385
        %v731 = vunpack.c.h.b16 %v385
        %v732 = vunpack.c.l.b16 %v386
        %v733 = vunpack.c.h.b16 %v386
        %v734 = vunpack.c.l.b16 %v387
        %v735 = vunpack.c.h.b16 %v387
        %v736 = vunpack.c.l.b16 %v388
        %v737 = vunpack.c.h.b16 %v388
        %v738 = vunpack.c.l.b16 %v389
        %v739 = vunpack.c.h.b16 %v389
        %v740 = vunpack.c.l.b16 %v390
        %v741 = vunpack.c.h.b16 %v390
        %v742 = vunpack.c.l.b16 %v391
        %v743 = vunpack.c.h.b16 %v391
        %v744 = vunpack.c.l.b16 %v392
        %v745 = vunpack.c.h.b16 %v392
        %v746 = vunpack.c.l.b16 %v393
        %v747 = vunpack.c.h.b16 %v393
        %v748 = vunpack.c.l.b16 %v394
        %v749 = vunpack.c.h.b16 %v394
        %v750 = vunpack.c.l.b16 %v395
        %v751 = vunpack.c.h.b16 %v395
        %v752 = vunpack.c.l.b16 %v396
        %v753 = vunpack.c.h.b16 %v396
        %v754 = vunpack.c.l.b16 %v397
        %v755 = vunpack.c.h.b16 %v397
        %v756 = vunpack.c.l.b16 %v398
        %v757 = vunpack.c.h.b16 %v398
        %v758 = vunpack.c.l.b16 %v399
        %v759 = vunpack.c.h.b16 %v399
        %v760 = vunpack.c.l.b16 %v400
        %v761 = vunpack.c.h.b16 %v400
        %v762 = vunpack.c.l.b16 %v401
        %v763 = vunpack.c.h.b16 %v401
        %v764 = vunpack.c.l.b16 %v402
        %v765 = vunpack.c.h.b16 %v402
        %v766 = vunpack.c.l.b16 %v403
        %v767 = vunpack.c.h.b16 %v403
        %v768 = vunpack.c.l.b16 %v404
        %v769 = vunpack.c.h.b16 %v404
        %v770 = vunpack.c.l.b16 %v405
        %v771 = vunpack.c.h.b16 %v405
        %v772 = vunpack.c.l.b16 %v406
        %v773 = vunpack.c.h.b16 %v406
        %v774 = vunpack.c.l.b16 %v407
        %v775 = vunpack.c.h.b16 %v407
        %v776 = vunpack.c.l.b16 %v408
        %v777 = vunpack.c.h.b16 %v408
        %v778 = vunpack.c.l.b16 %v409
        %v779 = vunpack.c.h.b16 %v409
        %v780 = vunpack.c.l.b16 %v410
        %v781 = vunpack.c.h.b16 %v410
        %v782 = vunpack.c.l.b16 %v411
        %v783 = vunpack.c.h.b16 %v411
        %v784 = vunpack.c.l.b16 %v412
        %v785 = vunpack.c.h.b16 %v412
        %v786 = vunpack.c.l.b16 %v413
        %v787 = vunpack.c.h.b16 %v413
        %v788 = vunpack.c.l.b16 %v414
        %v789 = vunpack.c.h.b16 %v414
        %v790 = vunpack.c.l.b16 %v415
        %v791 = vunpack.c.h.b16 %v415
        %v792 = vunpack.c.l.b16 %v416
        %v793 = vunpack.c.h.b16 %v416
        %v794 = vunpack.c.l.b16 %v417
        %v795 = vunpack.c.h.b16 %v417
        %v796 = vunpack.c.l.b16 %v418
        %v797 = vunpack.c.h.b16 %v418
        %v798 = vunpack.c.l.b16 %v419
        %v799 = vunpack.c.h.b16 %v419
        %v800 = vunpack.c.l.b16 %v420
        %v801 = vunpack.c.h.b16 %v420
        %v802 = vunpack.c.l.b16 %v421
        %v803 = vunpack.c.h.b16 %v421
        %v804 = vunpack.c.l.b16 %v422
        %v805 = vunpack.c.h.b16 %v422
        %v806 = vunpack.c.l.b16 %v423
        %v807 = vunpack.c.h.b16 %v423
        %v808 = vunpack.c.l.b16 %v424
        %v809 = vunpack.c.h.b16 %v424
        %v810 = vunpack.c.l.b16 %v425
        %v811 = vunpack.c.h.b16 %v425
        %v812 = vunpack.c.l.b16 %v426
        %v813 = vunpack.c.h.b16 %v426
        %v814 = vunpack.c.l.b16 %v427
        %v815 = vunpack.c.h.b16 %v427
        %v816 = vunpack.c.l.b16 %v428
        %v817 = vunpack.c.h.b16 %v428
        %v818 = vunpack.c.l.b16 %v429
        %v819 = vunpack.c.h.b16 %v429
        %v820 = vunpack.c.l.b16 %v430
        %v821 = vunpack.c.h.b16 %v430
        %v822 = vunpack.c.l.b16 %v431
        %v823 = vunpack.c.h.b16 %v431
        %v824 = vunpack.c.l.b16 %v432
        %v825 = vunpack.c.h.b16 %v432
        %v826 = vunpack.c.l.b16 %v433
        %v827 = vunpack.c.h.b16 %v433
        %v828 = vunpack.c.l.b16 %v434
        %v829 = vunpack.c.h.b16 %v434
        %v830 = vunpack.c.l.b16 %v435
        %v831 = vunpack.c.h.b16 %v435
        %v832 = vunpack.c.l.b16 %v436
        %v833 = vunpack.c.h.b16 %v436
        %v834 = vunpack.c.l.b16 %v437
        %v835 = vunpack.c.h.b16 %v437
        %v836 = vpack.c.b16 %v584, %v580
        %v837 = vpack.c.b16 %v585, %v581
        %v838 = vpack.c.b16 %v586, %v582
        %v839 = vpack.c.b16 %v587, %v583
        %v840 = vpack.c.b16 %v592, %v588
        %v841 = vpack.c.b16 %v593, %v589
        %v842 = vpack.c.b16 %v594, %v590
        %v843 = vpack.c.b16 %v595, %v591
        %v844 = vpack.c.b16 %v600, %v596
        %v845 = vpack.c.b16 %v601, %v597
        %v846 = vpack.c.b16 %v602, %v598
        %v847 = vpack.c.b16 %v603, %v599
        %v848 = vpack.c.b16 %v608, %v604
        %v849 = vpack.c.b16 %v609, %v605
        %v850 = vpack.c.b16 %v610, %v606
        %v851 = vpack.c.b16 %v611, %v607
        %v852 = vpack.c.b16 %v616, %v612
        %v853 = vpack.c.b16 %v617, %v613
        %v854 = vpack.c.b16 %v618, %v614
        %v855 = vpack.c.b16 %v619, %v615
        %v856 = vpack.c.b16 %v624, %v620
        %v857 = vpack.c.b16 %v625, %v621
        %v858 = vpack.c.b16 %v626, %v622
        %v859 = vpack.c.b16 %v627, %v623
        %v860 = vpack.c.b16 %v632, %v628
        %v861 = vpack.c.b16 %v633, %v629
        %v862 = vpack.c.b16 %v634, %v630
        %v863 = vpack.c.b16 %v635, %v631
        %v864 = vpack.c.b16 %v640, %v636
        %v865 = vpack.c.b16 %v641, %v637
        %v866 = vpack.c.b16 %v642, %v638
        %v867 = vpack.c.b16 %v643, %v639
        %v868 = vpack.c.b16 %v648, %v644
        %v869 = vpack.c.b16 %v649, %v645
        %v870 = vpack.c.b16 %v650, %v646
        %v871 = vpack.c.b16 %v651, %v647
        %v872 = vpack.c.b16 %v656, %v652
        %v873 = vpack.c.b16 %v657, %v653
        %v874 = vpack.c.b16 %v658, %v654
        %v875 = vpack.c.b16 %v659, %v655
        %v876 = vpack.c.b16 %v664, %v660
        %v877 = vpack.c.b16 %v665, %v661
        %v878 = vpack.c.b16 %v666, %v662
        %v879 = vpack.c.b16 %v667, %v663
        %v880 = vpack.c.b16 %v672, %v668
        %v881 = vpack.c.b16 %v673, %v669
        %v882 = vpack.c.b16 %v674, %v670
        %v883 = vpack.c.b16 %v675, %v671
        %v884 = vpack.c.b16 %v680, %v676
        %v885 = vpack.c.b16 %v681, %v677
        %v886 = vpack.c.b16 %v682, %v678
        %v887 = vpack.c.b16 %v683, %v679
        %v888 = vpack.c.b16 %v688, %v684
        %v889 = vpack.c.b16 %v689, %v685
        %v890 = vpack.c.b16 %v690, %v686
        %v891 = vpack.c.b16 %v691, %v687
        %v892 = vpack.c.b16 %v696, %v692
        %v893 = vpack.c.b16 %v697, %v693
        %v894 = vpack.c.b16 %v698, %v694
        %v895 = vpack.c.b16 %v699, %v695
        %v896 = vpack.c.b16 %v704, %v700
        %v897 = vpack.c.b16 %v705, %v701
        %v898 = vpack.c.b16 %v706, %v702
        %v899 = vpack.c.b16 %v707, %v703
        %v900 = vpack.c.b16 %v712, %v708
        %v901 = vpack.c.b16 %v713, %v709
        %v902 = vpack.c.b16 %v714, %v710
        %v903 = vpack.c.b16 %v715, %v711
        %v904 = vpack.c.b16 %v720, %v716
        %v905 = vpack.c.b16 %v721, %v717
        %v906 = vpack.c.b16 %v722, %v718
        %v907 = vpack.c.b16 %v723, %v719
        %v908 = vpack.c.b16 %v728, %v724
        %v909 = vpack.c.b16 %v729, %v725
        %v910 = vpack.c.b16 %v730, %v726
        %v911 = vpack.c.b16 %v731, %v727
        %v912 = vpack.c.b16 %v736, %v732
        %v913 = vpack.c.b16 %v737, %v733
        %v914 = vpack.c.b16 %v738, %v734
        %v915 = vpack.c.b16 %v739, %v735
        %v916 = vpack.c.b16 %v744, %v740
        %v917 = vpack.c.b16 %v745, %v741
        %v918 = vpack.c.b16 %v746, %v742
        %v919 = vpack.c.b16 %v747, %v743
        %v920 = vpack.c.b16 %v752, %v748
        %v921 = vpack.c.b16 %v753, %v749
        %v922 = vpack.c.b16 %v754, %v750
        %v923 = vpack.c.b16 %v755, %v751
        %v924 = vpack.c.b16 %v760, %v756
        %v925 = vpack.c.b16 %v761, %v757
        %v926 = vpack.c.b16 %v762, %v758
        %v927 = vpack.c.b16 %v763, %v759
        %v928 = vpack.c.b16 %v768, %v764
        %v929 = vpack.c.b16 %v769, %v765
        %v930 = vpack.c.b16 %v770, %v766
        %v931 = vpack.c.b16 %v771, %v767
        %v932 = vpack.c.b16 %v776, %v772
        %v933 = vpack.c.b16 %v777, %v773
        %v934 = vpack.c.b16 %v778, %v774
        %v935 = vpack.c.b16 %v779, %v775
        %v936 = vpack.c.b16 %v784, %v780
        %v937 = vpack.c.b16 %v785, %v781
        %v938 = vpack.c.b16 %v786, %v782
        %v939 = vpack.c.b16 %v787, %v783
        %v940 = vpack.c.b16 %v792, %v788
        %v941 = vpack.c.b16 %v793, %v789
        %v942 = vpack.c.b16 %v794, %v790
        %v943 = vpack.c.b16 %v795, %v791
        %v944 = vpack.c.b16 %v800, %v796
        %v945 = vpack.c.b16 %v801, %v797
        %v946 = vpack.c.b16 %v802, %v798
        %v947 = vpack.c.b16 %v803, %v799
        %v948 = vpack.c.b16 %v808, %v804
        %v949 = vpack.c.b16 %v809, %v805
        %v950 = vpack.c.b16 %v810, %v806
        %v951 = vpack.c.b16 %v811, %v807
        %v952 = vpack.c.b16 %v816, %v812
        %v953 = vpack.c.b16 %v817, %v813
        %v954 = vpack.c.b16 %v818, %v814
        %v955 = vpack.c.b16 %v819, %v815
        %v956 = vpack.c.b16 %v824, %v820
        %v957 = vpack.c.b16 %v825, %v821
        %v958 = vpack.c.b16 %v826, %v822
        %v959 = vpack.c.b16 %v827, %v823
        %v960 = vpack.c.b16 %v832, %v828
        %v961 = vpack.c.b16 %v833, %v829
        %v962 = vpack.c.b16 %v834, %v830
        %v963 = vpack.c.b16 %v835, %v831
        %1092 = vmatprep.subr.bf16.mxu0 %v837
        %1093 = vmatpush1.bf16.msra.mxu0 %v836
        %1094 = vmatprep.subr.bf16.mxu0 %v841
        %1095 = vmatpush1.bf16.msra.mxu0 %v840
        %1096 = vmatprep.subr.bf16.mxu0 %v845
        %1097 = vmatpush1.bf16.msra.mxu0 %v844
        %1098 = vmatprep.subr.bf16.mxu0 %v849
        %1099 = vmatpush1.bf16.msra.mxu0 %v848
        %1100 = vmatprep.subr.bf16.mxu0 %v853
        %1101 = vmatpush1.bf16.msra.mxu0 %v852
        %1102 = vmatprep.subr.bf16.mxu0 %v857
        %1103 = vmatpush1.bf16.msra.mxu0 %v856
        %1104 = vmatprep.subr.bf16.mxu0 %v861
        %1105 = vmatpush1.bf16.msra.mxu0 %v860
        %1106 = vmatprep.subr.bf16.mxu0 %v865
        %1107 = vmatpush1.bf16.msra.mxu0 %v864
        %1108 = vmatprep.subr.bf16.mxu0 %v869
        %1109 = vmatpush1.bf16.msra.mxu0 %v868
        %1110 = vmatprep.subr.bf16.mxu0 %v873
        %1111 = vmatpush1.bf16.msra.mxu0 %v872
        %1112 = vmatprep.subr.bf16.mxu0 %v877
        %1113 = vmatpush1.bf16.msra.mxu0 %v876
        %1114 = vmatprep.subr.bf16.mxu0 %v881
        %1115 = vmatpush1.bf16.msra.mxu0 %v880
        %1116 = vmatprep.subr.bf16.mxu0 %v885
        %1117 = vmatpush1.bf16.msra.mxu0 %v884
        %1118 = vmatprep.subr.bf16.mxu0 %v889
        %1119 = vmatpush1.bf16.msra.mxu0 %v888
        %1120 = vmatprep.subr.bf16.mxu0 %v893
        %1121 = vmatpush1.bf16.msra.mxu0 %v892
        %1122 = vmatprep.subr.bf16.mxu0 %v897
        %1123 = vmatpush1.bf16.msra.mxu0 %v896
        %1124 = vmatprep.mubr.bf16.mxu0 %v445
        %1125 = vmatmul.mubr.bf16.gmra.mrb[0].mxu0 %v444
        %v1126 = vpop.f32.mrb[0].mxu0
        %v1127 = vadd.f32 0.0, %v1126
        %v1128 = vpop.f32.mrb[0].mxu0
        %v1129 = vadd.f32 0.0, %v1128
        %v1130 = vpop.f32.mrb[0].mxu0
        %v1131 = vpop.f32.mrb[0].mxu0
        %1132 = vdwg.mxu0
        %1133 = vmatprep.subr.bf16.mxu0 %v901
        %1134 = vmatpush1.bf16.msra.mxu0 %v900
        %1135 = vmatprep.subr.bf16.mxu0 %v905
        %1136 = vmatpush1.bf16.msra.mxu0 %v904
        %1137 = vmatprep.subr.bf16.mxu0 %v909
        %1138 = vmatpush1.bf16.msra.mxu0 %v908
        %1139 = vmatprep.subr.bf16.mxu0 %v913
        %1140 = vmatpush1.bf16.msra.mxu0 %v912
        %1141 = vmatprep.subr.bf16.mxu0 %v917
        %1142 = vmatpush1.bf16.msra.mxu0 %v916
        %1143 = vmatprep.subr.bf16.mxu0 %v921
        %1144 = vmatpush1.bf16.msra.mxu0 %v920
        %1145 = vmatprep.subr.bf16.mxu0 %v925
        %1146 = vmatpush1.bf16.msra.mxu0 %v924
        %1147 = vmatprep.subr.bf16.mxu0 %v929
        %1148 = vmatpush1.bf16.msra.mxu0 %v928
        %1149 = vmatprep.subr.bf16.mxu0 %v933
        %1150 = vmatpush1.bf16.msra.mxu0 %v932
        %1151 = vmatprep.subr.bf16.mxu0 %v937
        %1152 = vmatpush1.bf16.msra.mxu0 %v936
        %1153 = vmatprep.subr.bf16.mxu0 %v941
        %1154 = vmatpush1.bf16.msra.mxu0 %v940
        %1155 = vmatprep.subr.bf16.mxu0 %v945
        %1156 = vmatpush1.bf16.msra.mxu0 %v944
        %1157 = vmatprep.subr.bf16.mxu0 %v949
        %1158 = vmatpush1.bf16.msra.mxu0 %v948
        %1159 = vmatprep.subr.bf16.mxu0 %v953
        %1160 = vmatpush1.bf16.msra.mxu0 %v952
        %1161 = vmatprep.subr.bf16.mxu0 %v957
        %1162 = vmatpush1.bf16.msra.mxu0 %v956
        %1163 = vmatprep.subr.bf16.mxu0 %v961
        %1164 = vmatpush1.bf16.msra.mxu0 %v960
        %1165 = vmatprep.mubr.bf16.mxu0 %v447
        %1166 = vmatmul.mubr.bf16.gmra.mrb[0].mxu0 %v446
        %v1167 = vpop.f32.mrb[0].mxu0
        %v1168 = vadd.f32 %v1127, %v1167
        %v1169 = vpop.f32.mrb[0].mxu0
        %v1170 = vadd.f32 %v1129, %v1169
        %v1171 = vpop.f32.mrb[0].mxu0
        %v1172 = vpop.f32.mrb[0].mxu0
        %1173 = vdwg.mxu0
        %1174 = vmatprep.subr.bf16.mxu0 %v839
        %1175 = vmatpush1.bf16.msra.mxu0 %v838
        %1176 = vmatprep.subr.bf16.mxu0 %v843
        %1177 = vmatpush1.bf16.msra.mxu0 %v842
        %1178 = vmatprep.subr.bf16.mxu0 %v847
        %1179 = vmatpush1.bf16.msra.mxu0 %v846
        %1180 = vmatprep.subr.bf16.mxu0 %v851
        %1181 = vmatpush1.bf16.msra.mxu0 %v850
        %1182 = vmatprep.subr.bf16.mxu0 %v855
        %1183 = vmatpush1.bf16.msra.mxu0 %v854
        %1184 = vmatprep.subr.bf16.mxu0 %v859
        %1185 = vmatpush1.bf16.msra.mxu0 %v858
        %1186 = vmatprep.subr.bf16.mxu0 %v863
        %1187 = vmatpush1.bf16.msra.mxu0 %v862
        %1188 = vmatprep.subr.bf16.mxu0 %v867
        %1189 = vmatpush1.bf16.msra.mxu0 %v866
        %1190 = vmatprep.subr.bf16.mxu0 %v871
        %1191 = vmatpush1.bf16.msra.mxu0 %v870
        %1192 = vmatprep.subr.bf16.mxu0 %v875
        %1193 = vmatpush1.bf16.msra.mxu0 %v874
        %1194 = vmatprep.subr.bf16.mxu0 %v879
        %1195 = vmatpush1.bf16.msra.mxu0 %v878
        %1196 = vmatprep.subr.bf16.mxu0 %v883
        %1197 = vmatpush1.bf16.msra.mxu0 %v882
        %1198 = vmatprep.subr.bf16.mxu0 %v887
        %1199 = vmatpush1.bf16.msra.mxu0 %v886
        %1200 = vmatprep.subr.bf16.mxu0 %v891
        %1201 = vmatpush1.bf16.msra.mxu0 %v890
        %1202 = vmatprep.subr.bf16.mxu0 %v895
        %1203 = vmatpush1.bf16.msra.mxu0 %v894
        %1204 = vmatprep.subr.bf16.mxu0 %v899
        %1205 = vmatpush1.bf16.msra.mxu0 %v898
        %1206 = vmatprep.mubr.bf16.mxu0 %v445
        %1207 = vmatmul.mubr.bf16.gmra.mrb[0].mxu0 %v444
        %v1208 = vpop.f32.mrb[0].mxu0
        %v1209 = vadd.f32 0.0, %v1208
        %v1210 = vpop.f32.mrb[0].mxu0
        %v1211 = vadd.f32 0.0, %v1210
        %v1212 = vpop.f32.mrb[0].mxu0
        %v1213 = vpop.f32.mrb[0].mxu0
        %1214 = vdwg.mxu0
        %1215 = vmatprep.subr.bf16.mxu0 %v903
        %1216 = vmatpush1.bf16.msra.mxu0 %v902
        %1217 = vmatprep.subr.bf16.mxu0 %v907
        %1218 = vmatpush1.bf16.msra.mxu0 %v906
        %1219 = vmatprep.subr.bf16.mxu0 %v911
        %1220 = vmatpush1.bf16.msra.mxu0 %v910
        %1221 = vmatprep.subr.bf16.mxu0 %v915
        %1222 = vmatpush1.bf16.msra.mxu0 %v914
        %1223 = vmatprep.subr.bf16.mxu0 %v919
        %1224 = vmatpush1.bf16.msra.mxu0 %v918
        %1225 = vmatprep.subr.bf16.mxu0 %v923
        %1226 = vmatpush1.bf16.msra.mxu0 %v922
        %1227 = vmatprep.subr.bf16.mxu0 %v927
        %1228 = vmatpush1.bf16.msra.mxu0 %v926
        %1229 = vmatprep.subr.bf16.mxu0 %v931
        %1230 = vmatpush1.bf16.msra.mxu0 %v930
        %1231 = vmatprep.subr.bf16.mxu0 %v935
        %1232 = vmatpush1.bf16.msra.mxu0 %v934
        %1233 = vmatprep.subr.bf16.mxu0 %v939
        %1234 = vmatpush1.bf16.msra.mxu0 %v938
        %1235 = vmatprep.subr.bf16.mxu0 %v943
        %1236 = vmatpush1.bf16.msra.mxu0 %v942
        %1237 = vmatprep.subr.bf16.mxu0 %v947
        %1238 = vmatpush1.bf16.msra.mxu0 %v946
        %1239 = vmatprep.subr.bf16.mxu0 %v951
        %1240 = vmatpush1.bf16.msra.mxu0 %v950
        %1241 = vmatprep.subr.bf16.mxu0 %v955
        %1242 = vmatpush1.bf16.msra.mxu0 %v954
        %1243 = vmatprep.subr.bf16.mxu0 %v959
        %1244 = vmatpush1.bf16.msra.mxu0 %v958
        %1245 = vmatprep.subr.bf16.mxu0 %v963
        %1246 = vmatpush1.bf16.msra.mxu0 %v962
        %1247 = vmatprep.mubr.bf16.mxu0 %v447
        %1248 = vmatmul.mubr.bf16.gmra.mrb[0].mxu0 %v446
        %v1249 = vpop.f32.mrb[0].mxu0
        %v1250 = vadd.f32 %v1209, %v1249
        %v1251 = vpop.f32.mrb[0].mxu0
        %v1252 = vadd.f32 %v1211, %v1251
        %v1253 = vpop.f32.mrb[0].mxu0
        %v1254 = vpop.f32.mrb[0].mxu0
        %1255 = vdwg.mxu0
        %v1256 = vadd.f32 %v304, %v1168
        %v1257 = vadd.f32 %v305, %v1170
        %v1258 = vadd.f32 %v306, %v1250
        %v1259 = vadd.f32 %v307, %v1252
        %1260 = vst [vmem:[#allocation2] sm:$0xff] %v1256
        %1261 = vst [vmem:[#allocation2 + $0x8] sm:$0xff] %v1257
        %1262 = vst [vmem:[#allocation2 + $0x10] sm:$0xff] %v1258
        %1263 = vst [vmem:[#allocation2 + $0x18] sm:$0xff] %v1259
        %p1264 = scmp.eq.s32.totalorder %s28, 1
        // Predicated region
        $region53: #{tpu_custom_call.1} parent=35 // pred_check
          %p1265 = pneg %p1264
        $region54: #{tpu_custom_call.1} parent=35 // pred_check_branch
          %1267 = sbr.rel (%p1265) target = $region56
        $region55: #{tpu_custom_call.1} parent=35 // pred_region
          %s1268 = smul.u32 4, 64
          %s1269 = smul.u32 %s1268, 1
          %s1270 = sshll.u32 %s1269, 4
          %1271 = dma.done [#allocation4], %s1270
          %v1272 = vld [vmem:[#allocation2] sm:$0xff]
          %v1273 = vld [vmem:[#allocation2 + $0x8] sm:$0xff]
          %v1274 = vld [vmem:[#allocation2 + $0x10] sm:$0xff]
          %v1275 = vld [vmem:[#allocation2 + $0x18] sm:$0xff]
          %v1276 = vld [vmem:[%s2] sm:$0xf]
          %v1278 = vlaneseq
          %v1279 = vshrl.u32 %v1278, 7
          %v1280 = vsub.s32 0, %v1279
          %v1281 = vrot.slane %v1276, %v1280
          %v1282 = vlaneseq
          %v1283 = vshrl.u32 %v1282, 7
          %v1284 = vsub.s32 1, %v1283
          %v1285 = vrot.slane %v1276, %v1284
          %v1286 = vlaneseq
          %v1287 = vshrl.u32 %v1286, 7
          %v1288 = vsub.s32 2, %v1287
          %v1289 = vrot.slane %v1276, %v1288
          %v1290 = vlaneseq
          %v1291 = vshrl.u32 %v1290, 7
          %v1292 = vsub.s32 3, %v1291
          %v1293 = vrot.slane %v1276, %v1292
          %v1298 = vadd.f32 %v1272, %v1281
          %v1299 = vadd.f32 %v1273, %v1285
          %v1300 = vadd.f32 %v1274, %v1289
          %v1301 = vadd.f32 %v1275, %v1293
          %v1302 = vmul.f32 %v1298, %v1298
          %v1303 = vmul.f32 %v1299, %v1299
          %v1304 = vmul.f32 %v1300, %v1300
          %v1305 = vmul.f32 %v1301, %v1301
          %v1306 = vadd.f32 %v1302, %v1303
          %v1307 = vadd.f32 %v1306, %v1304
          %v1308 = vadd.f32 %v1307, %v1305
          %1309 = vadd.xlane.f32.xlu0 %v1308
          %v1310 = vpop.xlane.xlu0 %1309
          %v1311 = vrsqrt.pop %v1310
          %v1312 = vmul.f32 %v1310, %v1311
          %vm1313 = vcmp.eq.f32.partialorder %v1310, inf
          %v1314 = vsel %vm1313, %v1310, %v1312
          %vm1315 = vcmp.eq.f32.partialorder %v1310, 0.0
          %v1316 = vand.u32 %v1310, 2147483648
          %v1317 = vsel %vm1315, %v1316, %v1314
          %v1318 = vmax.f32 %v1317, 1e-12
          %v1319 = vrcp.pop %v1318
          %v1320 = vpack.c.bf16 %v1298, %v1298
          %v1321 = vpack.c.bf16 %v1299, %v1299
          %v1322 = vpack.c.bf16 %v1300, %v1300
          %v1323 = vpack.c.bf16 %v1301, %v1301
          %v1324 = vld [vmem:[#allocation3] sm:$0xff]
          %v1325 = vld [vmem:[#allocation3 + $0x8] sm:$0xff]
          %v1326 = vld [vmem:[#allocation3 + $0x10] sm:$0xff]
          %v1327 = vld [vmem:[#allocation3 + $0x18] sm:$0xff]
          %v1328 = vld [vmem:[#allocation3 + $0x20] sm:$0xff]
          %v1329 = vld [vmem:[#allocation3 + $0x28] sm:$0xff]
          %v1330 = vld [vmem:[#allocation3 + $0x30] sm:$0xff]
          %v1331 = vld [vmem:[#allocation3 + $0x38] sm:$0xff]
          %v1332 = vld [vmem:[#allocation3 + $0x40] sm:$0xff]
          %v1333 = vld [vmem:[#allocation3 + $0x48] sm:$0xff]
          %v1334 = vld [vmem:[#allocation3 + $0x50] sm:$0xff]
          %v1335 = vld [vmem:[#allocation3 + $0x58] sm:$0xff]
          %v1336 = vld [vmem:[#allocation3 + $0x60] sm:$0xff]
          %v1337 = vld [vmem:[#allocation3 + $0x68] sm:$0xff]
          %v1338 = vld [vmem:[#allocation3 + $0x70] sm:$0xff]
          %v1339 = vld [vmem:[#allocation3 + $0x78] sm:$0xff]
          %v1340 = vld [vmem:[#allocation3 + $0x80] sm:$0xff]
          %v1341 = vld [vmem:[#allocation3 + $0x88] sm:$0xff]
          %v1342 = vld [vmem:[#allocation3 + $0x90] sm:$0xff]
          %v1343 = vld [vmem:[#allocation3 + $0x98] sm:$0xff]
          %v1344 = vld [vmem:[#allocation3 + $0xa0] sm:$0xff]
          %v1345 = vld [vmem:[#allocation3 + $0xa8] sm:$0xff]
          %v1346 = vld [vmem:[#allocation3 + $0xb0] sm:$0xff]
          %v1347 = vld [vmem:[#allocation3 + $0xb8] sm:$0xff]
          %v1348 = vld [vmem:[#allocation3 + $0xc0] sm:$0xff]
          %v1349 = vld [vmem:[#allocation3 + $0xc8] sm:$0xff]
          %v1350 = vld [vmem:[#allocation3 + $0xd0] sm:$0xff]
          %v1351 = vld [vmem:[#allocation3 + $0xd8] sm:$0xff]
          %v1352 = vld [vmem:[#allocation3 + $0xe0] sm:$0xff]
          %v1353 = vld [vmem:[#allocation3 + $0xe8] sm:$0xff]
          %v1354 = vld [vmem:[#allocation3 + $0xf0] sm:$0xff]
          %v1355 = vld [vmem:[#allocation3 + $0xf8] sm:$0xff]
          %1356 = vmatprep.subr.bf16.mxu0 0
          %1357 = vmatpush1.bf16.msra.mxu0 %v1324
          %1358 = vmatprep.subr.bf16.mxu0 0
          %1359 = vmatpush1.bf16.msra.mxu0 %v1325
          %1360 = vmatprep.subr.bf16.mxu0 0
          %1361 = vmatpush1.bf16.msra.mxu0 %v1326
          %1362 = vmatprep.subr.bf16.mxu0 0
          %1363 = vmatpush1.bf16.msra.mxu0 %v1327
          %1364 = vmatprep.subr.bf16.mxu0 0
          %1365 = vmatpush1.bf16.msra.mxu0 %v1328
          %1366 = vmatprep.subr.bf16.mxu0 0
          %1367 = vmatpush1.bf16.msra.mxu0 %v1329
          %1368 = vmatprep.subr.bf16.mxu0 0
          %1369 = vmatpush1.bf16.msra.mxu0 %v1330
          %1370 = vmatprep.subr.bf16.mxu0 0
          %1371 = vmatpush1.bf16.msra.mxu0 %v1331
          %1372 = vmatprep.subr.bf16.mxu0 0
          %1373 = vmatpush1.bf16.msra.mxu0 %v1332
          %1374 = vmatprep.subr.bf16.mxu0 0
          %1375 = vmatpush1.bf16.msra.mxu0 %v1333
          %1376 = vmatprep.subr.bf16.mxu0 0
          %1377 = vmatpush1.bf16.msra.mxu0 %v1334
          %1378 = vmatprep.subr.bf16.mxu0 0
          %1379 = vmatpush1.bf16.msra.mxu0 %v1335
          %1380 = vmatprep.subr.bf16.mxu0 0
          %1381 = vmatpush1.bf16.msra.mxu0 %v1336
          %1382 = vmatprep.subr.bf16.mxu0 0
          %1383 = vmatpush1.bf16.msra.mxu0 %v1337
          %1384 = vmatprep.subr.bf16.mxu0 0
          %1385 = vmatpush1.bf16.msra.mxu0 %v1338
          %1386 = vmatprep.subr.bf16.mxu0 0
          %1387 = vmatpush1.bf16.msra.mxu0 %v1339
          %1388 = vmatprep.mubr.bf16.mxu0 %v1321
          %1389 = vmatmul.mubr.bf16.gmra.mrb[0].mxu0 %v1320
          %v1390 = vpop.f32.mrb[0].mxu0
          %v1391 = vadd.f32 0.0, %v1390
          %v1392 = vpop.f32.mrb[0].mxu0
          %v1393 = vpop.f32.mrb[0].mxu0
          %v1394 = vpop.f32.mrb[0].mxu0
          %1395 = vdwg.mxu0
          %1396 = vmatprep.subr.bf16.mxu0 0
          %1397 = vmatpush1.bf16.msra.mxu0 %v1340
          %1398 = vmatprep.subr.bf16.mxu0 0
          %1399 = vmatpush1.bf16.msra.mxu0 %v1341
          %1400 = vmatprep.subr.bf16.mxu0 0
          %1401 = vmatpush1.bf16.msra.mxu0 %v1342
          %1402 = vmatprep.subr.bf16.mxu0 0
          %1403 = vmatpush1.bf16.msra.mxu0 %v1343
          %1404 = vmatprep.subr.bf16.mxu0 0
          %1405 = vmatpush1.bf16.msra.mxu0 %v1344
          %1406 = vmatprep.subr.bf16.mxu0 0
          %1407 = vmatpush1.bf16.msra.mxu0 %v1345
          %1408 = vmatprep.subr.bf16.mxu0 0
          %1409 = vmatpush1.bf16.msra.mxu0 %v1346
          %1410 = vmatprep.subr.bf16.mxu0 0
          %1411 = vmatpush1.bf16.msra.mxu0 %v1347
          %1412 = vmatprep.subr.bf16.mxu0 0
          %1413 = vmatpush1.bf16.msra.mxu0 %v1348
          %1414 = vmatprep.subr.bf16.mxu0 0
          %1415 = vmatpush1.bf16.msra.mxu0 %v1349
          %1416 = vmatprep.subr.bf16.mxu0 0
          %1417 = vmatpush1.bf16.msra.mxu0 %v1350
          %1418 = vmatprep.subr.bf16.mxu0 0
          %1419 = vmatpush1.bf16.msra.mxu0 %v1351
          %1420 = vmatprep.subr.bf16.mxu0 0
          %1421 = vmatpush1.bf16.msra.mxu0 %v1352
          %1422 = vmatprep.subr.bf16.mxu0 0
          %1423 = vmatpush1.bf16.msra.mxu0 %v1353
          %1424 = vmatprep.subr.bf16.mxu0 0
          %1425 = vmatpush1.bf16.msra.mxu0 %v1354
          %1426 = vmatprep.subr.bf16.mxu0 0
          %1427 = vmatpush1.bf16.msra.mxu0 %v1355
          %1428 = vmatprep.mubr.bf16.mxu0 %v1323
          %1429 = vmatmul.mubr.bf16.gmra.mrb[0].mxu0 %v1322
          %v1430 = vpop.f32.mrb[0].mxu0
          %v1431 = vadd.f32 %v1391, %v1430
          %v1432 = vpop.f32.mrb[0].mxu0
          %v1433 = vpop.f32.mrb[0].mxu0
          %v1434 = vpop.f32.mrb[0].mxu0
          %1435 = vdwg.mxu0
          %v1436 = vmul.f32 %v1431, %v1319
          %v1437 = vlaneseq
          %v1438 = vand.u32 %v1437, 127
          %v1439 = vld [vmem:[%s283] sm:$0xff]
          %1440 = vset.pattern.permute.xlu0 0
          %1441 = vperm.xlu0 %1440, %v1439
          %v1442 = vpop.permute.xlu0 %1441
          %vm1443 = vcmp.eq.s32.totalorder %v1438, %v1442
          %v1444 = vsub.f32 %v1436, 0.35
          %v1445 = vsel %vm1443, %v1444, %v1436
          %v1446 = vmul.f32 %v1445, 30.0
          %1447 = vst [vmem:[#allocation10] sm:$0xff] %v1446
        $region56: #{tpu_custom_call.1} parent=35 // pred_fallthru
          _
        // Predicated region
        $region57: #{tpu_custom_call.1} parent=35 // pred_check
          %p1448 = pneg %p154
        $region58: #{tpu_custom_call.1} parent=35 // pred_check_branch
          %1450 = sbr.rel (%p1448) target = $region60
        $region59: #{tpu_custom_call.1} parent=35 // pred_region
          %s1452 = ssub.s32 128, 128
          %1453 = vsyncadd [#allocation7], %s1452
          %s1454 = smul.addr %s27, 128
          %s1455 = scalar_lea.hbm %s5, %s1454
          %s1457 = sshll.u32 [#allocation10], 4
          %s1458 = int_to_ptr.vmem [resolvable:$true] %s1457
          %1460 = dma.vmem_to_hbm [thread:$0]  %s1458, 128, %s1455, [#allocation7]
        $region60: #{tpu_custom_call.1} parent=35 // pred_fallthru
          _
        // Predicated region
        $region61: #{tpu_custom_call.1} parent=35 // pred_check
          %p1461 = pneg %p154
        $region62: #{tpu_custom_call.1} parent=35 // pred_check_branch
          %1463 = sbr.rel (%p1461) target = $region64
        $region63: #{tpu_custom_call.1} parent=35 // pred_region
          %1464 = dma.done [#allocation7], 128
        $region64: #{tpu_custom_call.1} parent=35 // pred_fallthru
          _
      $region36: #{tpu_custom_call.1} parent=5 // pred_fallthru
        _
      %p1465 = scmp.le.s32.totalorder 2, %s18
      // Predicated region
      $region65: #{tpu_custom_call.1} parent=5 // pred_check
        %p1466 = pneg %p1465
      $region66: #{tpu_custom_call.1} parent=5 // pred_check_branch
        %1468 = sbr.rel (%p1466) target = $region68
      $region67: #{tpu_custom_call.1} parent=5 // pred_region
        %s1469 = ssub.s32 %s18, 2
      $region68: #{tpu_custom_call.1} parent=5 // pred_fallthru
        _
    $region6: #{tpu_custom_call.1} parent=1 // loop_footer
      %s22 = sadd.s32 1, %s18
    $region7: #{tpu_custom_call.1} parent=1 // loop_footer_branch
      %17 = sbr.rel target = $region3
    $region8: #{tpu_custom_call.1} parent=1 // loop_exit
      _
    %1470 = vsyncpa [#allocation6], 1
    %s1471 = scalar_lea.sflag [#allocation6], 1
    %1472 = vsyncpa %s1471, 1
    %1473 = vsyncpa [#allocation9], 1
    %s1474 = scalar_lea.sflag [#allocation9], 1
    %1475 = vsyncpa %s1474, 1
    %1476 = vsyncpa [#allocation7], 1
    %s1477 = scalar_lea.sflag [#allocation7], 1
    %1478 = vsyncpa %s1477, 1
  %1479 = vsyncmov [#allocation4]
  %s1480 = vpop.sfrf %1479
  %p1481 = scmp.eq.s32.totalorder %s1480, 0
  %p1482 = pneg %p1481
  %1484 = shalt.err (%p1482)

</llo_original>
